<compile_context>
chip_gen: v6e
topology: v6e:2x2x1
jax: 0.10.0
libtpu: 0.0.40
codegen_flags: <defaults>
</compile_context>

<pallas_src>
import functools
import math

import jax
import jax.numpy as jnp
from jax.experimental import pallas as pl
from jax.experimental.pallas import tpu as pltpu


_TM_MAX = 256      # row tile: >= MXU height on all generations once N allows it
_TF_TARGET = 512   # d_ff streaming chunk target (columns of W1 / rows of W2)
_TN_TARGET = 512   # output-feature chunk target for the plain linear kernel
_SQRT_HALF = 0.7071067811865476  # 1/sqrt(2) for exact-erf GELU


def _round_up(x, m):
    return ((x + m - 1) // m) * m


def _pick_chunk(d, target):
    """Largest multiple-of-128 divisor of d that is <= target, else d (full dim)."""
    if d <= target:
        return d
    t = (min(target, d) // 128) * 128
    while t >= 128:
        if d % t == 0:
            return t
        t -= 128
    return d


def _row_tile(n):
    # multiple of 16 so bf16 sublane packing is also satisfied
    return min(_TM_MAX, _round_up(n, 16))


def _vmem_limit(nbytes):
    # Clamp into [32 MiB, 64 MiB]: above the scoped default, below physical VMEM
    # on every generation (v5e/v6e: 128 MiB, v7x: 64 MiB).
    return int(min(max(nbytes, 32 << 20), 64 << 20))


# ---------------------------------------------------------------------------
# Fused FeedForward kernel: linear1 -> GELU -> (dropout: identity) -> linear2
# ---------------------------------------------------------------------------
def _ffn_kernel(x_ref, w1_ref, b1_ref, w2_ref, b2_ref, o_ref, acc_ref):
    # grid = (row_tiles, ff_chunks); the ff axis is last ("arbitrary") so the
    # float32 accumulator carried in VMEM scratch is valid across it.
    f = pl.program_id(1)

    @pl.when(f == 0)
    def _init():
        acc_ref[...] = jnp.zeros_like(acc_ref)

    # linear1 chunk: native-dtype operands straight into the MXU, f32 accumulate.
    h = jnp.dot(x_ref[...], w1_ref[...], preferred_element_type=jnp.float32)
    h = h + b1_ref[...].astype(jnp.float32)

    # exact erf GELU (matches torch.nn.GELU() default), computed in f32.
    h = 0.5 * h * (1.0 + jax.lax.erf(h * _SQRT_HALF))

    # dropout -> identity (eval mode)
    # TODO(synk): training-mode dropout (pltpu.prng_random_bits mask) not implemented.

    # linear2 partial product, accumulated in f32.
    acc_ref[...] += jnp.dot(h.astype(w2_ref.dtype), w2_ref[...],
                            preferred_element_type=jnp.float32)

    @pl.when(f == pl.num_programs(1) - 1)
    def _finalize():
        o_ref[...] = (acc_ref[...]
                      + b2_ref[...].astype(jnp.float32)).astype(o_ref.dtype)


def _ffn_pallas_2d(x2d, w1, b1, w2, b2, *, tm, tf):
    n, d_model = x2d.shape
    d_ff = w1.shape[1]
    isz = jnp.dtype(x2d.dtype).itemsize
    # double-buffered streamed blocks + f32 accumulator + margin
    est = (2 * (tm * d_model + d_model * tf + tf + tf * d_model + d_model
                + tm * d_model) * isz
           + tm * d_model * 4 + (2 << 20))
    return pl.pallas_call(
        _ffn_kernel,
        out_shape=jax.ShapeDtypeStruct((n, d_model), x2d.dtype),
        grid_spec=pltpu.PrefetchScalarGridSpec(
            num_scalar_prefetch=0,
            grid=(n // tm, d_ff // tf),
            in_specs=[
                pl.BlockSpec((tm, d_model), lambda i, f: (i, 0)),   # x rows
                pl.BlockSpec((d_model, tf), lambda i, f: (0, f)),   # W1 chunk
                pl.BlockSpec((1, tf), lambda i, f: (0, f)),         # b1 chunk
                pl.BlockSpec((tf, d_model), lambda i, f: (f, 0)),   # W2 chunk
                pl.BlockSpec((1, d_model), lambda i, f: (0, 0)),    # b2 (tiny)
            ],
            out_specs=pl.BlockSpec((tm, d_model), lambda i, f: (i, 0)),
            scratch_shapes=[pltpu.VMEM((tm, d_model), jnp.float32)],
        ),
        compiler_params=pltpu.CompilerParams(
            dimension_semantics=("parallel", "arbitrary"),
            vmem_limit_bytes=_vmem_limit(est)),
    )(x2d, w1, b1.reshape(1, d_ff), w2, b2.reshape(1, d_model))


def feed_forward(x, w1, b1, w2, b2, *, use_pallas=True):
    """x: [..., d_model] -> [..., d_model].  Weights stored [in, out]."""
    if not use_pallas:   # pure-JAX reference path (same math)
        h = jnp.matmul(x, w1) + b1
        h = 0.5 * h * (1.0 + jax.lax.erf(h * _SQRT_HALF))
        return jnp.matmul(h, w2) + b2

    *lead, d_model = x.shape
    d_ff = w1.shape[1]
    n = math.prod(lead)
    x2d = x.reshape(n, d_model)

    tm = _row_tile(n)
    n_pad = _round_up(n, tm)
    if n_pad != n:               # pad rows instead of asserting N % tm == 0
        x2d = jnp.pad(x2d, ((0, n_pad - n), (0, 0)))

    # size the d_ff chunk so double-buffered W1+W2 chunks stay within ~24 MiB
    isz = jnp.dtype(x.dtype).itemsize
    max_tf = max(128, ((24 << 20) // (4 * d_model * isz)) // 128 * 128)
    tf = _pick_chunk(d_ff, min(_TF_TARGET, max_tf))

    out = _ffn_pallas_2d(x2d, w1, b1, w2, b2, tm=tm, tf=tf)
    return out[:n].reshape(*lead, d_model)


# ---------------------------------------------------------------------------
# Tiled linear (matmul + bias) kernel, used for the attention projections
# ---------------------------------------------------------------------------
def _linear_kernel(x_ref, w_ref, b_ref, o_ref):
    y = jnp.dot(x_ref[...], w_ref[...], preferred_element_type=jnp.float32)
    o_ref[...] = (y + b_ref[...].astype(jnp.float32)).astype(o_ref.dtype)


def _linear_pallas_2d(x2d, w, b, *, tm, tn):
    n, d_in = x2d.shape
    d_out = w.shape[1]
    isz = jnp.dtype(x2d.dtype).itemsize
    est = 2 * (tm * d_in + d_in * tn + tn + tm * tn) * isz + (2 << 20)
    return pl.pallas_call(
        _linear_kernel,
        out_shape=jax.ShapeDtypeStruct((n, d_out), x2d.dtype),
        grid_spec=pltpu.PrefetchScalarGridSpec(
            num_scalar_prefetch=0,
            grid=(n // tm, d_out // tn),
            in_specs=[
                pl.BlockSpec((tm, d_in), lambda i, j: (i, 0)),
                pl.BlockSpec((d_in, tn), lambda i, j: (0, j)),
                pl.BlockSpec((1, tn), lambda i, j: (0, j)),
            ],
            out_specs=pl.BlockSpec((tm, tn), lambda i, j: (i, j)),
        ),
        compiler_params=pltpu.CompilerParams(
            dimension_semantics=("parallel", "parallel"),
            vmem_limit_bytes=_vmem_limit(est)),
    )(x2d, w, b.reshape(1, d_out))


def linear(x, w, b, *, use_pallas=True):
    if not use_pallas:
        return jnp.matmul(x, w) + b
    *lead, d_in = x.shape
    d_out = w.shape[1]
    n = math.prod(lead)
    x2d = x.reshape(n, d_in)
    tm = _row_tile(n)
    n_pad = _round_up(n, tm)
    if n_pad != n:
        x2d = jnp.pad(x2d, ((0, n_pad - n), (0, 0)))
    tn = _pick_chunk(d_out, _TN_TARGET)
    out = _linear_pallas_2d(x2d, w, b, tm=tm, tn=tn)
    return out[:n].reshape(*lead, d_out)


# ---------------------------------------------------------------------------
# Plain-JAX glue: layernorm, attention core, SLAM segment routing
# ---------------------------------------------------------------------------
def layer_norm(x, gamma, beta, eps=1e-5):
    mean = jnp.mean(x, axis=-1, keepdims=True)
    var = jnp.mean(jnp.square(x - mean), axis=-1, keepdims=True)
    return (x - mean) * jax.lax.rsqrt(var + eps) * gamma + beta


def mhsa(x, p, num_heads, *, use_pallas=True):
    B, S, D = x.shape
    dh = D // num_heads
    qkv = linear(x, p["wqkv"], p["bqkv"], use_pallas=use_pallas)
    qkv = qkv.reshape(B, S, 3, num_heads, dh).transpose(2, 0, 3, 1, 4)
    q, k, v = qkv[0], qkv[1], qkv[2]
    scores = jnp.einsum("bhqd,bhkd->bhqk", q, k) * (dh ** -0.5)
    # TODO(synk): attention mask path not implemented (demo uses mask=None).
    w = jax.nn.softmax(scores, axis=-1)
    # dropout on attention weights: identity (eval mode)
    out = jnp.einsum("bhqk,bhkd->bhqd", w, v)
    out = out.transpose(0, 2, 1, 3).reshape(B, S, D)
    return linear(out, p["wo"], p["bo"], use_pallas=use_pallas)


def encoder_block(x, p, num_heads, *, use_pallas=True):
    attn = mhsa(x, p["attn"], num_heads, use_pallas=use_pallas)
    x = layer_norm(x + attn, p["ln1_g"], p["ln1_b"])          # dropout: identity
    ff = feed_forward(x, p["w1"], p["b1"], p["w2"], p["b2"], use_pallas=use_pallas)
    x = layer_norm(x + ff, p["ln2_g"], p["ln2_b"])            # dropout: identity
    return x


def slam_forward(x, params, *, num_heads, ef_cycles, use_pallas=True):
    B, S, D = x.shape
    f60 = int(S * 0.6)
    s40 = int(S * 0.4)
    # the reference recombination only lines up when int(0.6*S) == S - int(0.4*S)
    assert f60 == S - s40, "seq_len must satisfy int(0.6*S) == S - int(0.4*S)"

    x = encoder_block(x, params["initial"], num_heads, use_pallas=use_pallas)
    for i in range(ef_cycles):
        seg_a = jnp.concatenate([x[:, :f60], x[:, s40:]], axis=1)
        seg_b = jnp.concatenate([x[:, s40:], x[:, :f60]], axis=1)
        pa = encoder_block(seg_a, params["ef_A"][i], num_heads, use_pallas=use_pallas)
        pb = encoder_block(seg_b, params["ef_B"][i], num_heads, use_pallas=use_pallas)
        pa1 = pa[:, :f60]            # processed x[:f60]
        pb1 = pb[:, :f60]            # processed x[s40:]
        pb2 = pb[:, f60:]            # processed x[:f60] (second pass)
        head = pa1[:, :s40]                                   # count = 1
        overlap = 0.5 * (pa1[:, s40:f60] + pb2[:, s40:f60])   # count = 2 -> average
        tail = pb1[:, f60 - s40:]                             # count = 1
        x = jnp.concatenate([head, overlap, tail], axis=1)
    x = encoder_block(x, params["final"], num_heads, use_pallas=use_pallas)
    return x


# ---------------------------------------------------------------------------
# Parameter init (mirrors nn.Linear / nn.LayerNorm defaults; weights are [in, out])
# ---------------------------------------------------------------------------
def _init_linear(key, d_in, d_out, dtype):
    kw, kb = jax.random.split(key)
    lim = 1.0 / math.sqrt(d_in)
    w = jax.random.uniform(kw, (d_in, d_out), dtype, -lim, lim)
    b = jax.random.uniform(kb, (d_out,), dtype, -lim, lim)
    return w, b


def _init_block(key, d_model, d_ff, dtype):
    k1, k2, k3, k4 = jax.random.split(key, 4)
    wqkv, bqkv = _init_linear(k1, d_model, 3 * d_model, dtype)
    wo, bo = _init_linear(k2, d_model, d_model, dtype)
    w1, b1 = _init_linear(k3, d_model, d_ff, dtype)
    w2, b2 = _init_linear(k4, d_ff, d_model, dtype)
    return dict(
        attn=dict(wqkv=wqkv, bqkv=bqkv, wo=wo, bo=bo),
        ln1_g=jnp.ones((d_model,), dtype), ln1_b=jnp.zeros((d_model,), dtype),
        w1=w1, b1=b1, w2=w2, b2=b2,
        ln2_g=jnp.ones((d_model,), dtype), ln2_b=jnp.zeros((d_model,), dtype),
    )


def init_slam_params(key, d_model, d_ff, ef_cycles, dtype=jnp.float32):
    keys = jax.random.split(key, 2 + 2 * ef_cycles)
    return dict(
        initial=_init_block(keys[0], d_model, d_ff, dtype),
        ef_A=[_init_block(keys[1 + i], d_model, d_ff, dtype)
              for i in range(ef_cycles)],
        ef_B=[_init_block(keys[1 + ef_cycles + i], d_model, d_ff, dtype)
              for i in range(ef_cycles)],
        final=_init_block(keys[1 + 2 * ef_cycles], d_model, d_ff, dtype),
    )


if __name__ == "__main__":
    key = jax.random.PRNGKey(0)
    kx, kp = jax.random.split(key)

    # Small but tile-friendly shapes: d_model is a multiple of 128 (lane-dense,
    # unmasked output stores) and d_ff splits into two streamed 512-column chunks
    # so the f32-accumulator path is exercised.  seq_len=10 satisfies the SLAM
    # 40/60% split constraint of the reference model.
    batch, seq_len = 2, 10
    d_model, num_heads, d_ff, ef_cycles = 128, 4, 1024, 2

    x = jax.random.normal(kx, (batch, seq_len, d_model), jnp.float32)
    params = init_slam_params(kp, d_model, d_ff, ef_cycles)

    run_pallas = jax.jit(functools.partial(
        slam_forward, num_heads=num_heads, ef_cycles=ef_cycles, use_pallas=True))
    run_ref = jax.jit(functools.partial(
        slam_forward, num_heads=num_heads, ef_cycles=ef_cycles, use_pallas=False))

    out = jax.block_until_ready(run_pallas(x, params))
    ref = jax.block_until_ready(run_ref(x, params))

    assert out.shape == (batch, seq_len, d_model)
    assert jnp.allclose(out, ref, atol=1e-2, rtol=1e-2), float(
        jnp.max(jnp.abs(out - ref)))

    print("KERNEL_OK")
</pallas_src>

<mosaic_0001>
module attributes {stable_mosaic.version = 11 : i64} {
  func.func @_linear_kernel(%arg0: i32, %arg1: i32, %arg2: memref<32x128xf32, #tpu.memory_space<vmem>>, %arg3: memref<128x384xf32, #tpu.memory_space<vmem>>, %arg4: memref<1x384xf32, #tpu.memory_space<vmem>>, %arg5: memref<32x384xf32, #tpu.memory_space<vmem>>) attributes {dimension_semantics = [#tpu.dimension_semantics<parallel>, #tpu.dimension_semantics<parallel>], iteration_bounds = array<i64: 1, 1>, scalar_prefetch = 0 : i64, scratch_operands = 0 : i64, tpu.core_type = #tpu.core_type<tc>, window_params = [{transform_indices = @transform_0, window_bounds = array<i64: 32, 128>}, {transform_indices = @transform_1, window_bounds = array<i64: 128, 384>}, {transform_indices = @transform_2, window_bounds = array<i64: 1, 384>}, {transform_indices = @transform_3, window_bounds = array<i64: 32, 384>}]} {
    %c0 = arith.constant 0 : index
    %c0_0 = arith.constant 0 : index
    %0 = vector.load %arg2[%c0, %c0_0] : memref<32x128xf32, #tpu.memory_space<vmem>>, vector<32x128xf32>
    %c0_1 = arith.constant 0 : index
    %c0_2 = arith.constant 0 : index
    %1 = vector.load %arg3[%c0_1, %c0_2] : memref<128x384xf32, #tpu.memory_space<vmem>>, vector<128x384xf32>
    %cst = arith.constant dense<0.000000e+00> : vector<32x384xf32>
    %2 = tpu.matmul %0, %1, %cst {dimension_numbers = #tpu.dot_dimension_numbers<[1], [0], [0], [1], [0, 0, 1, 1], [], []>} : vector<32x128xf32>, vector<128x384xf32>, vector<32x384xf32> -> vector<32x384xf32>
    %c0_3 = arith.constant 0 : index
    %c0_4 = arith.constant 0 : index
    %3 = vector.load %arg4[%c0_3, %c0_4] : memref<1x384xf32, #tpu.memory_space<vmem>>, vector<1x384xf32>
    %4 = vector.broadcast %3 : vector<1x384xf32> to vector<32x384xf32>
    %5 = arith.addf %2, %4 : vector<32x384xf32>
    %c0_5 = arith.constant 0 : index
    %c0_6 = arith.constant 0 : index
    %6 = vector.load %arg5[%c0_5, %c0_6] : memref<32x384xf32, #tpu.memory_space<vmem>>, vector<32x384xf32>
    tpu.vector_store %arg5[%c0_5, %c0_6], %5 {strides = array<i32>} : memref<32x384xf32, #tpu.memory_space<vmem>>, vector<32x384xf32>,
    return
  }
  func.func @transform_0(%arg0: i32, %arg1: i32) -> (i32, i32) {
    %c0_i32 = arith.constant 0 : i32
    %c0_i32_0 = arith.constant 0 : i32
    return %arg0, %c0_i32 : i32, i32
  }
  func.func @transform_1(%arg0: i32, %arg1: i32) -> (i32, i32) {
    %c0_i32 = arith.constant 0 : i32
    %c0_i32_0 = arith.constant 0 : i32
    return %c0_i32, %arg1 : i32, i32
  }
  func.func @transform_2(%arg0: i32, %arg1: i32) -> (i32, i32) {
    %c0_i32 = arith.constant 0 : i32
    %c0_i32_0 = arith.constant 0 : i32
    return %c0_i32, %arg1 : i32, i32
  }
  func.func @transform_3(%arg0: i32, %arg1: i32) -> (i32, i32) {
    %c0_i32 = arith.constant 0 : i32
    return %arg0, %arg1 : i32, i32
  }
}

module attributes {stable_mosaic.version = 11 : i64} {
  func.func @_linear_kernel(%arg0: i32, %arg1: i32, %arg2: memref<32x128xf32, #tpu.memory_space<vmem>>, %arg3: memref<128x128xf32, #tpu.memory_space<vmem>>, %arg4: memref<1x128xf32, #tpu.memory_space<vmem>>, %arg5: memref<32x128xf32, #tpu.memory_space<vmem>>) attributes {dimension_semantics = [#tpu.dimension_semantics<parallel>, #tpu.dimension_semantics<parallel>], iteration_bounds = array<i64: 1, 1>, scalar_prefetch = 0 : i64, scratch_operands = 0 : i64, tpu.core_type = #tpu.core_type<tc>, window_params = [{transform_indices = @transform_0, window_bounds = array<i64: 32, 128>}, {transform_indices = @transform_1, window_bounds = array<i64: 128, 128>}, {transform_indices = @transform_2, window_bounds = array<i64: 1, 128>}, {transform_indices = @transform_3, window_bounds = array<i64: 32, 128>}]} {
    %c0 = arith.constant 0 : index
    %c0_0 = arith.constant 0 : index
    %0 = vector.load %arg2[%c0, %c0_0] : memref<32x128xf32, #tpu.memory_space<vmem>>, vector<32x128xf32>
    %c0_1 = arith.constant 0 : index
    %c0_2 = arith.constant 0 : index
    %1 = vector.load %arg3[%c0_1, %c0_2] : memref<128x128xf32, #tpu.memory_space<vmem>>, vector<128x128xf32>
    %cst = arith.constant dense<0.000000e+00> : vector<32x128xf32>
    %2 = tpu.matmul %0, %1, %cst {dimension_numbers = #tpu.dot_dimension_numbers<[1], [0], [0], [1], [0, 0, 1, 1], [], []>} : vector<32x128xf32>, vector<128x128xf32>, vector<32x128xf32> -> vector<32x128xf32>
    %c0_3 = arith.constant 0 : index
    %c0_4 = arith.constant 0 : index
    %3 = vector.load %arg4[%c0_3, %c0_4] : memref<1x128xf32, #tpu.memory_space<vmem>>, vector<1x128xf32>
    %4 = vector.broadcast %3 : vector<1x128xf32> to vector<32x128xf32>
    %5 = arith.addf %2, %4 : vector<32x128xf32>
    %c0_5 = arith.constant 0 : index
    %c0_6 = arith.constant 0 : index
    %6 = vector.load %arg5[%c0_5, %c0_6] : memref<32x128xf32, #tpu.memory_space<vmem>>, vector<32x128xf32>
    tpu.vector_store %arg5[%c0_5, %c0_6], %5 {strides = array<i32>} : memref<32x128xf32, #tpu.memory_space<vmem>>, vector<32x128xf32>,
    return
  }
  func.func @transform_0(%arg0: i32, %arg1: i32) -> (i32, i32) {
    %c0_i32 = arith.constant 0 : i32
    %c0_i32_0 = arith.constant 0 : i32
    return %arg0, %c0_i32 : i32, i32
  }
  func.func @transform_1(%arg0: i32, %arg1: i32) -> (i32, i32) {
    %c0_i32 = arith.constant 0 : i32
    %c0_i32_0 = arith.constant 0 : i32
    return %c0_i32, %arg1 : i32, i32
  }
  func.func @transform_2(%arg0: i32, %arg1: i32) -> (i32, i32) {
    %c0_i32 = arith.constant 0 : i32
    %c0_i32_0 = arith.constant 0 : i32
    return %c0_i32, %arg1 : i32, i32
  }
  func.func @transform_3(%arg0: i32, %arg1: i32) -> (i32, i32) {
    %c0_i32 = arith.constant 0 : i32
    return %arg0, %arg1 : i32, i32
  }
}

module attributes {stable_mosaic.version = 11 : i64} {
  func.func @_ffn_kernel(%arg0: i32, %arg1: i32, %arg2: memref<32x128xf32, #tpu.memory_space<vmem>>, %arg3: memref<128x512xf32, #tpu.memory_space<vmem>>, %arg4: memref<1x512xf32, #tpu.memory_space<vmem>>, %arg5: memref<512x128xf32, #tpu.memory_space<vmem>>, %arg6: memref<1x128xf32, #tpu.memory_space<vmem>>, %arg7: memref<32x128xf32, #tpu.memory_space<vmem>>, %arg8: memref<32x128xf32, #tpu.memory_space<vmem>>) attributes {dimension_semantics = [#tpu.dimension_semantics<parallel>, #tpu.dimension_semantics<arbitrary>], iteration_bounds = array<i64: 1, 2>, scalar_prefetch = 0 : i64, scratch_operands = 1 : i64, tpu.core_type = #tpu.core_type<tc>, window_params = [{transform_indices = @transform_0, window_bounds = array<i64: 32, 128>}, {transform_indices = @transform_1, window_bounds = array<i64: 128, 512>}, {transform_indices = @transform_2, window_bounds = array<i64: 1, 512>}, {transform_indices = @transform_3, window_bounds = array<i64: 512, 128>}, {pipeline_mode = #tpu.pipeline_mode<synchronous>, transform_indices = @transform_4, window_bounds = array<i64: 1, 128>}, {transform_indices = @transform_5, window_bounds = array<i64: 32, 128>}]} {
    %c0_i32 = arith.constant 0 : i32
    %0 = arith.cmpi eq, %arg1, %c0_i32 : i32
    %1 = arith.extui %0 : i1 to i32
    %c0_i32_0 = arith.constant 0 : i32
    %2 = arith.cmpi ne, %1, %c0_i32_0 : i32
    scf.if %2 {
      %cst_17 = arith.constant 0.000000e+00 : f32
      %25 = vector.broadcast %cst_17 : f32 to vector<32x128xf32>
      %c0_18 = arith.constant 0 : index
      %c0_19 = arith.constant 0 : index
      %26 = vector.load %arg8[%c0_18, %c0_19] : memref<32x128xf32, #tpu.memory_space<vmem>>, vector<32x128xf32>
      tpu.vector_store %arg8[%c0_18, %c0_19], %25 {strides = array<i32>} : memref<32x128xf32, #tpu.memory_space<vmem>>, vector<32x128xf32>,
    } else {
    }
    %c0 = arith.constant 0 : index
    %c0_1 = arith.constant 0 : index
    %3 = vector.load %arg2[%c0, %c0_1] : memref<32x128xf32, #tpu.memory_space<vmem>>, vector<32x128xf32>
    %c0_2 = arith.constant 0 : index
    %c0_3 = arith.constant 0 : index
    %4 = vector.load %arg3[%c0_2, %c0_3] : memref<128x512xf32, #tpu.memory_space<vmem>>, vector<128x512xf32>
    %cst = arith.constant dense<0.000000e+00> : vector<32x512xf32>
    %5 = tpu.matmul %3, %4, %cst {dimension_numbers = #tpu.dot_dimension_numbers<[1], [0], [0], [1], [0, 0, 1, 1], [], []>} : vector<32x128xf32>, vector<128x512xf32>, vector<32x512xf32> -> vector<32x512xf32>
    %c0_4 = arith.constant 0 : index
    %c0_5 = arith.constant 0 : index
    %6 = vector.load %arg4[%c0_4, %c0_5] : memref<1x512xf32, #tpu.memory_space<vmem>>, vector<1x512xf32>
    %7 = vector.broadcast %6 : vector<1x512xf32> to vector<32x512xf32>
    %8 = arith.addf %5, %7 : vector<32x512xf32>
    %cst_6 = arith.constant 5.000000e-01 : f32
    %9 = vector.broadcast %cst_6 : f32 to vector<32x512xf32>
    %10 = arith.mulf %9, %8 : vector<32x512xf32>
    %cst_7 = arith.constant 0.707106769 : f32
    %11 = vector.broadcast %cst_7 : f32 to vector<32x512xf32>
    %12 = arith.mulf %8, %11 : vector<32x512xf32>
    %13 = math.erf %12 : vector<32x512xf32>
    %cst_8 = arith.constant 1.000000e+00 : f32
    %14 = vector.broadcast %cst_8 : f32 to vector<32x512xf32>
    %15 = arith.addf %14, %13 : vector<32x512xf32>
    %16 = arith.mulf %10, %15 : vector<32x512xf32>
    %c0_9 = arith.constant 0 : index
    %c0_10 = arith.constant 0 : index
    %17 = vector.load %arg8[%c0_9, %c0_10] : memref<32x128xf32, #tpu.memory_space<vmem>>, vector<32x128xf32>
    %c0_11 = arith.constant 0 : index
    %c0_12 = arith.constant 0 : index
    %18 = vector.load %arg5[%c0_11, %c0_12] : memref<512x128xf32, #tpu.memory_space<vmem>>, vector<512x128xf32>
    %cst_13 = arith.constant dense<0.000000e+00> : vector<32x128xf32>
    %19 = tpu.matmul %16, %18, %cst_13 {dimension_numbers = #tpu.dot_dimension_numbers<[1], [0], [0], [1], [0, 0, 1, 1], [], []>} : vector<32x512xf32>, vector<512x128xf32>, vector<32x128xf32> -> vector<32x128xf32>
    %20 = arith.addf %17, %19 : vector<32x128xf32>
    %c0_14 = arith.constant 0 : index
    %c0_15 = arith.constant 0 : index
    %21 = vector.load %arg8[%c0_14, %c0_15] : memref<32x128xf32, #tpu.memory_space<vmem>>, vector<32x128xf32>
    tpu.vector_store %arg8[%c0_14, %c0_15], %20 {strides = array<i32>} : memref<32x128xf32, #tpu.memory_space<vmem>>, vector<32x128xf32>,
    %c1_i32 = arith.constant 1 : i32
    %22 = arith.cmpi eq, %arg1, %c1_i32 : i32
    %23 = arith.extui %22 : i1 to i32
    %c0_i32_16 = arith.constant 0 : i32
    %24 = arith.cmpi ne, %23, %c0_i32_16 : i32
    scf.if %24 {
      %c0_17 = arith.constant 0 : index
      %c0_18 = arith.constant 0 : index
      %25 = vector.load %arg8[%c0_17, %c0_18] : memref<32x128xf32, #tpu.memory_space<vmem>>, vector<32x128xf32>
      %c0_19 = arith.constant 0 : index
      %c0_20 = arith.constant 0 : index
      %26 = vector.load %arg6[%c0_19, %c0_20] : memref<1x128xf32, #tpu.memory_space<vmem>>, vector<1x128xf32>
      %27 = vector.broadcast %26 : vector<1x128xf32> to vector<32x128xf32>
      %28 = arith.addf %25, %27 : vector<32x128xf32>
      %c0_21 = arith.constant 0 : index
      %c0_22 = arith.constant 0 : index
      %29 = vector.load %arg7[%c0_21, %c0_22] : memref<32x128xf32, #tpu.memory_space<vmem>>, vector<32x128xf32>
      tpu.vector_store %arg7[%c0_21, %c0_22], %28 {strides = array<i32>} : memref<32x128xf32, #tpu.memory_space<vmem>>, vector<32x128xf32>,
    } else {
    }
    return
  }
  func.func @transform_0(%arg0: i32, %arg1: i32) -> (i32, i32) {
    %c0_i32 = arith.constant 0 : i32
    %c0_i32_0 = arith.constant 0 : i32
    return %arg0, %c0_i32 : i32, i32
  }
  func.func @transform_1(%arg0: i32, %arg1: i32) -> (i32, i32) {
    %c0_i32 = arith.constant 0 : i32
    %c0_i32_0 = arith.constant 0 : i32
    return %c0_i32, %arg1 : i32, i32
  }
  func.func @transform_2(%arg0: i32, %arg1: i32) -> (i32, i32) {
    %c0_i32 = arith.constant 0 : i32
    %c0_i32_0 = arith.constant 0 : i32
    return %c0_i32, %arg1 : i32, i32
  }
  func.func @transform_3(%arg0: i32, %arg1: i32) -> (i32, i32) {
    %c0_i32 = arith.constant 0 : i32
    %c0_i32_0 = arith.constant 0 : i32
    return %arg1, %c0_i32 : i32, i32
  }
  func.func @transform_4(%arg0: i32, %arg1: i32) -> (i32, i32) {
    %c0_i32 = arith.constant 0 : i32
    %c0_i32_0 = arith.constant 0 : i32
    %c0_i32_1 = arith.constant 0 : i32
    return %c0_i32, %c0_i32_0 : i32, i32
  }
  func.func @transform_5(%arg0: i32, %arg1: i32) -> (i32, i32) {
    %c0_i32 = arith.constant 0 : i32
    %c0_i32_0 = arith.constant 0 : i32
    return %arg0, %c0_i32 : i32, i32
  }
}

module attributes {stable_mosaic.version = 11 : i64} {
  func.func @_linear_kernel(%arg0: i32, %arg1: i32, %arg2: memref<32x128xf32, #tpu.memory_space<vmem>>, %arg3: memref<128x384xf32, #tpu.memory_space<vmem>>, %arg4: memref<1x384xf32, #tpu.memory_space<vmem>>, %arg5: memref<32x384xf32, #tpu.memory_space<vmem>>) attributes {dimension_semantics = [#tpu.dimension_semantics<parallel>, #tpu.dimension_semantics<parallel>], iteration_bounds = array<i64: 1, 1>, scalar_prefetch = 0 : i64, scratch_operands = 0 : i64, tpu.core_type = #tpu.core_type<tc>, window_params = [{transform_indices = @transform_0, window_bounds = array<i64: 32, 128>}, {transform_indices = @transform_1, window_bounds = array<i64: 128, 384>}, {transform_indices = @transform_2, window_bounds = array<i64: 1, 384>}, {transform_indices = @transform_3, window_bounds = array<i64: 32, 384>}]} {
    %c0 = arith.constant 0 : index
    %c0_0 = arith.constant 0 : index
    %0 = vector.load %arg2[%c0, %c0_0] : memref<32x128xf32, #tpu.memory_space<vmem>>, vector<32x128xf32>
    %c0_1 = arith.constant 0 : index
    %c0_2 = arith.constant 0 : index
    %1 = vector.load %arg3[%c0_1, %c0_2] : memref<128x384xf32, #tpu.memory_space<vmem>>, vector<128x384xf32>
    %cst = arith.constant dense<0.000000e+00> : vector<32x384xf32>
    %2 = tpu.matmul %0, %1, %cst {dimension_numbers = #tpu.dot_dimension_numbers<[1], [0], [0], [1], [0, 0, 1, 1], [], []>} : vector<32x128xf32>, vector<128x384xf32>, vector<32x384xf32> -> vector<32x384xf32>
    %c0_3 = arith.constant 0 : index
    %c0_4 = arith.constant 0 : index
    %3 = vector.load %arg4[%c0_3, %c0_4] : memref<1x384xf32, #tpu.memory_space<vmem>>, vector<1x384xf32>
    %4 = vector.broadcast %3 : vector<1x384xf32> to vector<32x384xf32>
    %5 = arith.addf %2, %4 : vector<32x384xf32>
    %c0_5 = arith.constant 0 : index
    %c0_6 = arith.constant 0 : index
    %6 = vector.load %arg5[%c0_5, %c0_6] : memref<32x384xf32, #tpu.memory_space<vmem>>, vector<32x384xf32>
    tpu.vector_store %arg5[%c0_5, %c0_6], %5 {strides = array<i32>} : memref<32x384xf32, #tpu.memory_space<vmem>>, vector<32x384xf32>,
    return
  }
  func.func @transform_0(%arg0: i32, %arg1: i32) -> (i32, i32) {
    %c0_i32 = arith.constant 0 : i32
    %c0_i32_0 = arith.constant 0 : i32
    return %arg0, %c0_i32 : i32, i32
  }
  func.func @transform_1(%arg0: i32, %arg1: i32) -> (i32, i32) {
    %c0_i32 = arith.constant 0 : i32
    %c0_i32_0 = arith.constant 0 : i32
    return %c0_i32, %arg1 : i32, i32
  }
  func.func @transform_2(%arg0: i32, %arg1: i32) -> (i32, i32) {
    %c0_i32 = arith.constant 0 : i32
    %c0_i32_0 = arith.constant 0 : i32
    return %c0_i32, %arg1 : i32, i32
  }
  func.func @transform_3(%arg0: i32, %arg1: i32) -> (i32, i32) {
    %c0_i32 = arith.constant 0 : i32
    return %arg0, %arg1 : i32, i32
  }
}

</mosaic_0001>

<llo_original>
// kernel: slam_forward.19
$region0: #{slam_forward.19}
  #allocation0 [shape = 'u32[]', space=smem, size = 0x4, offset = 0x4, fixed_abs, tag = 'smem constant byte address 0x4 - core index']
  #allocation1 [shape = 'u32[144,128]{1,0:T(1,128)}', space=vmem, size = 0x12000, scoped, tag = 'internal scratch']
  %s0 = inlined_call_operand.vmem [shape: f32[32,128], index: 0, kind: input, shape index: {}]
  %s1 = inlined_call_operand.vmem [shape: f32[128,128], index: 1, kind: input, shape index: {}]
  %s2 = inlined_call_operand.vmem [shape: f32[1,128], index: 2, kind: input, shape index: {}]
  %s3 = inlined_call_operand.vmem [shape: f32[32,128], index: 3, kind: output, shape index: {}]
  %s4 = sld [smem:[#allocation0]]
  $region22: #{slam_forward.19} parent=0
    _
  %s6 = ssub.s32 1, %s4
  %s7 = scalar_select 0, %s6, %s4
  // Predicated region
  $region2: #{slam_forward.19} parent=0 // pred_check
    _
  $region3: #{slam_forward.19} parent=0 // pred_check_branch
    %9 = sbr.rel (0) target = $region5
  $region4: #{slam_forward.19} parent=0 // pred_region
    _
  $region5: #{slam_forward.19} parent=0 // pred_fallthru
    _
  // Predicated region
  $region6: #{slam_forward.19} parent=0 // pred_check
    _
  $region7: #{slam_forward.19} parent=0 // pred_check_branch
    %11 = sbr.rel (0) target = $region9
  $region8: #{slam_forward.19} parent=0 // pred_region
    _
  $region9: #{slam_forward.19} parent=0 // pred_fallthru
    _
  // Predicated region
  $region10: #{slam_forward.19} parent=0 // pred_check
    _
  $region11: #{slam_forward.19} parent=0 // pred_check_branch
    %13 = sbr.rel (0) target = $region13
  $region12: #{slam_forward.19} parent=0 // pred_region
    _
  $region13: #{slam_forward.19} parent=0 // pred_fallthru
    _
  %v14 = vld [vmem:[%s0] sm:$0xff]
  %v15 = vld [vmem:[%s0 + $0x8] sm:$0xff]
  %v16 = vld [vmem:[%s0 + $0x10] sm:$0xff]
  %v17 = vld [vmem:[%s0 + $0x18] sm:$0xff]
  %v18 = vld [vmem:[%s1] sm:$0xff]
  %v19 = vld [vmem:[%s1 + $0x8] sm:$0xff]
  %v20 = vld [vmem:[%s1 + $0x10] sm:$0xff]
  %v21 = vld [vmem:[%s1 + $0x18] sm:$0xff]
  %v22 = vld [vmem:[%s1 + $0x20] sm:$0xff]
  %v23 = vld [vmem:[%s1 + $0x28] sm:$0xff]
  %v24 = vld [vmem:[%s1 + $0x30] sm:$0xff]
  %v25 = vld [vmem:[%s1 + $0x38] sm:$0xff]
  %v26 = vld [vmem:[%s1 + $0x40] sm:$0xff]
  %v27 = vld [vmem:[%s1 + $0x48] sm:$0xff]
  %v28 = vld [vmem:[%s1 + $0x50] sm:$0xff]
  %v29 = vld [vmem:[%s1 + $0x58] sm:$0xff]
  %v30 = vld [vmem:[%s1 + $0x60] sm:$0xff]
  %v31 = vld [vmem:[%s1 + $0x68] sm:$0xff]
  %v32 = vld [vmem:[%s1 + $0x70] sm:$0xff]
  %v33 = vld [vmem:[%s1 + $0x78] sm:$0xff]
  %v34 = vld [vmem:[%s2] sm:$0x1]
  %v36 = vlaneseq
  %v37 = vshrl.u32 %v36, 7
  %v38 = vsub.s32 0, %v37
  %v39 = vrot.slane %v34, %v38
  %41 = vmatprep.subr.mxu0 0.0
  %42 = vmatpush1.msra.mxu0 %v33
  %43 = vmatprep.subr.mxu0 0.0
  %44 = vmatpush1.msra.mxu0 %v32
  %45 = vmatprep.subr.mxu0 0.0
  %46 = vmatpush1.msra.mxu0 %v31
  %47 = vmatprep.subr.mxu0 0.0
  %48 = vmatpush1.msra.mxu0 %v30
  %49 = vmatprep.subr.mxu0 0.0
  %50 = vmatpush1.msra.mxu0 %v29
  %51 = vmatprep.subr.mxu0 0.0
  %52 = vmatpush1.msra.mxu0 %v28
  %53 = vmatprep.subr.mxu0 0.0
  %54 = vmatpush1.msra.mxu0 %v27
  %55 = vmatprep.subr.mxu0 0.0
  %56 = vmatpush1.msra.mxu0 %v26
  %57 = vmatprep.subr.mxu0 0.0
  %58 = vmatpush1.msra.mxu0 %v25
  %59 = vmatprep.subr.mxu0 0.0
  %60 = vmatpush1.msra.mxu0 %v24
  %61 = vmatprep.subr.mxu0 0.0
  %62 = vmatpush1.msra.mxu0 %v23
  %63 = vmatprep.subr.mxu0 0.0
  %64 = vmatpush1.msra.mxu0 %v22
  %65 = vmatprep.subr.mxu0 0.0
  %66 = vmatpush1.msra.mxu0 %v21
  %67 = vmatprep.subr.mxu0 0.0
  %68 = vmatpush1.msra.mxu0 %v20
  %69 = vmatprep.subr.mxu0 0.0
  %70 = vmatpush1.msra.mxu0 %v19
  %71 = vmatprep.subr.mxu0 0.0
  %72 = vmatpush1.msra.mxu0 %v18
  %73 = vmatprep.subr.mxu0 0.0
  %74 = vmatpush2.msra.mxu0 0.0
  %75 = vmatprep.subr.mxu0 0.0
  %76 = vmatpush2.msra.mxu0 0.0
  %77 = vmatprep.subr.mxu0 0.0
  %78 = vmatpush2.msra.mxu0 0.0
  %79 = vmatprep.subr.mxu0 0.0
  %80 = vmatpush2.msra.mxu0 0.0
  %81 = vmatprep.subr.mxu0 0.0
  %82 = vmatpush2.msra.mxu0 0.0
  %83 = vmatprep.subr.mxu0 0.0
  %84 = vmatpush2.msra.mxu0 0.0
  %85 = vmatprep.subr.mxu0 0.0
  %86 = vmatpush2.msra.mxu0 0.0
  %87 = vmatprep.subr.mxu0 0.0
  %88 = vmatpush2.msra.mxu0 0.0
  %89 = vmatprep.subr.mxu0 0.0
  %90 = vmatpush2.msra.mxu0 0.0
  %91 = vmatprep.subr.mxu0 0.0
  %92 = vmatpush2.msra.mxu0 0.0
  %93 = vmatprep.subr.mxu0 0.0
  %94 = vmatpush2.msra.mxu0 0.0
  %95 = vmatprep.subr.mxu0 0.0
  %96 = vmatpush2.msra.mxu0 0.0
  %97 = vmatprep.subr.mxu0 0.0
  %98 = vmatpush2.msra.mxu0 0.0
  %99 = vmatprep.subr.mxu0 0.0
  %100 = vmatpush2.msra.mxu0 0.0
  %101 = vmatprep.subr.mxu0 0.0
  %102 = vmatpush2.msra.mxu0 0.0
  %103 = vmatprep.subr.mxu0 0.0
  %104 = vmatpush2.msra.mxu0 0.0
  %105 = vmatprep.mubr.f32.mxu0 0.0
  %106 = vmatmul.mubr.f32.gmra.mxu0 %v14
  %v107 = vpop.f32.mrf.mxu0
  %v108 = vadd.f32 %v39, %v107
  %v109 = vpop.f32.mrf.mxu0
  %110 = vmatprep.mubr.f32.mxu0 0.0
  %111 = vmatmul.mubr.f32.gmra.mxu0 %v15
  %v112 = vpop.f32.mrf.mxu0
  %v113 = vadd.f32 %v39, %v112
  %v114 = vpop.f32.mrf.mxu0
  %115 = vmatprep.mubr.f32.mxu0 0.0
  %116 = vmatmul.mubr.f32.gmra.mxu0 %v16
  %v117 = vpop.f32.mrf.mxu0
  %v118 = vadd.f32 %v39, %v117
  %v119 = vpop.f32.mrf.mxu0
  %120 = vmatprep.mubr.f32.mxu0 0.0
  %121 = vmatmul.mubr.f32.gmra.mxu0 %v17
  %v122 = vpop.f32.mrf.mxu0
  %v123 = vadd.f32 %v39, %v122
  %v124 = vpop.f32.mrf.mxu0
  %125 = vdwg.mxu0
  %126 = vst [vmem:[%s3] sm:$0xff] %v108
  %127 = vst [vmem:[%s3 + $0x8] sm:$0xff] %v113
  %128 = vst [vmem:[%s3 + $0x10] sm:$0xff] %v118
  %129 = vst [vmem:[%s3 + $0x18] sm:$0xff] %v123
  // Predicated region
  $region14: #{slam_forward.19} parent=0 // pred_check
    _
  $region15: #{slam_forward.19} parent=0 // pred_check_branch
    %131 = sbr.rel (0) target = $region17
  $region16: #{slam_forward.19} parent=0 // pred_region
    _
  $region17: #{slam_forward.19} parent=0 // pred_fallthru
    _
  // Predicated region
  $region18: #{slam_forward.19} parent=0 // pred_check
    _
  $region19: #{slam_forward.19} parent=0 // pred_check_branch
    %133 = sbr.rel (0) target = $region21
  $region20: #{slam_forward.19} parent=0 // pred_region
    _
  $region21: #{slam_forward.19} parent=0 // pred_fallthru
    _

// kernel: slam_forward.18
$region0: #{slam_forward.18}
  #allocation0 [shape = 'u32[]', space=smem, size = 0x4, offset = 0x4, fixed_abs, tag = 'smem constant byte address 0x4 - core index']
  #allocation1 [shape = 'u32[144,128]{1,0:T(1,128)}', space=vmem, size = 0x12000, scoped, tag = 'internal scratch']
  %s0 = inlined_call_operand.vmem [shape: f32[32,128], index: 0, kind: input, shape index: {}]
  %s1 = inlined_call_operand.hbm [shape: f32[128,384], index: 1, kind: input, shape index: {}]
  %s2 = inlined_call_operand.vmem [shape: f32[1,384], index: 2, kind: input, shape index: {}]
  %s3 = inlined_call_operand.vmem [shape: f32[32,384], index: 3, kind: output, shape index: {}]
  %s4 = sld [smem:[#allocation0]]
  $region26: #{slam_forward.18} parent=0
    _
  %s6 = ssub.s32 1, %s4
  %s7 = scalar_select 0, %s6, %s4
  $region1: #{slam_forward.18} parent=0
    #allocation2 [shape = 'u8[196608]{0}', space=vmem, size = 0x30000, scoped, tag = 'input window, operand 1, single buffered']
    #allocation3 [shape = 's32[1]{0}', space=sflag, size = 0x4, scoped, tag = 'scoped memory for slam_forward.18']
    %8 = vsyncpa [#allocation3], 0
    // Predicated region
    $region2: #{slam_forward.18} parent=1 // pred_check
      _
    $region3: #{slam_forward.18} parent=1 // pred_check_branch
      %10 = sbr.rel (0) target = $region5
    $region4: #{slam_forward.18} parent=1 // pred_region
      _
    $region5: #{slam_forward.18} parent=1 // pred_fallthru
      _
    // Predicated region
    $region6: #{slam_forward.18} parent=1 // pred_check
      _
    $region7: #{slam_forward.18} parent=1 // pred_check_branch
      %12 = sbr.rel (0) target = $region9
    $region8: #{slam_forward.18} parent=1 // pred_region
      %s14 = ssub.s32 6144, 6144
      %15 = vsyncadd [#allocation3], %s14
      %s16 = sshll.u32 [#allocation2], 4
      %s17 = int_to_ptr.vmem [resolvable:$true] %s16
      %22 = dma.hbm_to_vmem [thread:$0]  %s1, 6144, %s17, [#allocation3], 384, 384, 24
    $region9: #{slam_forward.18} parent=1 // pred_fallthru
      _
    // Predicated region
    $region10: #{slam_forward.18} parent=1 // pred_check
      _
    $region11: #{slam_forward.18} parent=1 // pred_check_branch
      %24 = sbr.rel (0) target = $region13
    $region12: #{slam_forward.18} parent=1 // pred_region
      _
    $region13: #{slam_forward.18} parent=1 // pred_fallthru
      _
    // Predicated region
    $region14: #{slam_forward.18} parent=1 // pred_check
      _
    $region15: #{slam_forward.18} parent=1 // pred_check_branch
      %26 = sbr.rel (0) target = $region17
    $region16: #{slam_forward.18} parent=1 // pred_region
      %27 = dma.done [#allocation3], 6144
    $region17: #{slam_forward.18} parent=1 // pred_fallthru
      _
    %v28 = vld [vmem:[%s0] sm:$0xff]
    %v29 = vld [vmem:[%s0 + $0x8] sm:$0xff]
    %v30 = vld [vmem:[%s0 + $0x10] sm:$0xff]
    %v31 = vld [vmem:[%s0 + $0x18] sm:$0xff]
    %v32 = vld [vmem:[#allocation2] sm:$0xff]
    %v33 = vld [vmem:[#allocation2 + $0x8] sm:$0xff]
    %v34 = vld [vmem:[#allocation2 + $0x10] sm:$0xff]
    %v35 = vld [vmem:[#allocation2 + $0x18] sm:$0xff]
    %v36 = vld [vmem:[#allocation2 + $0x20] sm:$0xff]
    %v37 = vld [vmem:[#allocation2 + $0x28] sm:$0xff]
    %v38 = vld [vmem:[#allocation2 + $0x30] sm:$0xff]
    %v39 = vld [vmem:[#allocation2 + $0x38] sm:$0xff]
    %v40 = vld [vmem:[#allocation2 + $0x40] sm:$0xff]
    %v41 = vld [vmem:[#allocation2 + $0x48] sm:$0xff]
    %v42 = vld [vmem:[#allocation2 + $0x50] sm:$0xff]
    %v43 = vld [vmem:[#allocation2 + $0x58] sm:$0xff]
    %v44 = vld [vmem:[#allocation2 + $0x60] sm:$0xff]
    %v45 = vld [vmem:[#allocation2 + $0x68] sm:$0xff]
    %v46 = vld [vmem:[#allocation2 + $0x70] sm:$0xff]
    %v47 = vld [vmem:[#allocation2 + $0x78] sm:$0xff]
    %v48 = vld [vmem:[#allocation2 + $0x80] sm:$0xff]
    %v49 = vld [vmem:[#allocation2 + $0x88] sm:$0xff]
    %v50 = vld [vmem:[#allocation2 + $0x90] sm:$0xff]
    %v51 = vld [vmem:[#allocation2 + $0x98] sm:$0xff]
    %v52 = vld [vmem:[#allocation2 + $0xa0] sm:$0xff]
    %v53 = vld [vmem:[#allocation2 + $0xa8] sm:$0xff]
    %v54 = vld [vmem:[#allocation2 + $0xb0] sm:$0xff]
    %v55 = vld [vmem:[#allocation2 + $0xb8] sm:$0xff]
    %v56 = vld [vmem:[#allocation2 + $0xc0] sm:$0xff]
    %v57 = vld [vmem:[#allocation2 + $0xc8] sm:$0xff]
    %v58 = vld [vmem:[#allocation2 + $0xd0] sm:$0xff]
    %v59 = vld [vmem:[#allocation2 + $0xd8] sm:$0xff]
    %v60 = vld [vmem:[#allocation2 + $0xe0] sm:$0xff]
    %v61 = vld [vmem:[#allocation2 + $0xe8] sm:$0xff]
    %v62 = vld [vmem:[#allocation2 + $0xf0] sm:$0xff]
    %v63 = vld [vmem:[#allocation2 + $0xf8] sm:$0xff]
    %v64 = vld [vmem:[#allocation2 + $0x100] sm:$0xff]
    %v65 = vld [vmem:[#allocation2 + $0x108] sm:$0xff]
    %v66 = vld [vmem:[#allocation2 + $0x110] sm:$0xff]
    %v67 = vld [vmem:[#allocation2 + $0x118] sm:$0xff]
    %v68 = vld [vmem:[#allocation2 + $0x120] sm:$0xff]
    %v69 = vld [vmem:[#allocation2 + $0x128] sm:$0xff]
    %v70 = vld [vmem:[#allocation2 + $0x130] sm:$0xff]
    %v71 = vld [vmem:[#allocation2 + $0x138] sm:$0xff]
    %v72 = vld [vmem:[#allocation2 + $0x140] sm:$0xff]
    %v73 = vld [vmem:[#allocation2 + $0x148] sm:$0xff]
    %v74 = vld [vmem:[#allocation2 + $0x150] sm:$0xff]
    %v75 = vld [vmem:[#allocation2 + $0x158] sm:$0xff]
    %v76 = vld [vmem:[#allocation2 + $0x160] sm:$0xff]
    %v77 = vld [vmem:[#allocation2 + $0x168] sm:$0xff]
    %v78 = vld [vmem:[#allocation2 + $0x170] sm:$0xff]
    %v79 = vld [vmem:[#allocation2 + $0x178] sm:$0xff]
    %v80 = vld [vmem:[%s2] sm:$0x7]
    %v82 = vlaneseq
    %v83 = vshrl.u32 %v82, 7
    %v84 = vsub.s32 0, %v83
    %v85 = vrot.slane %v80, %v84
    %v86 = vlaneseq
    %v87 = vshrl.u32 %v86, 7
    %v88 = vsub.s32 1, %v87
    %v89 = vrot.slane %v80, %v88
    %v90 = vlaneseq
    %v91 = vshrl.u32 %v90, 7
    %v92 = vsub.s32 2, %v91
    %v93 = vrot.slane %v80, %v92
    %97 = vmatprep.subr.mxu0 %v78
    %98 = vmatpush1.msra.mxu0 %v77
    %99 = vmatprep.subr.mxu0 %v75
    %100 = vmatpush1.msra.mxu0 %v74
    %101 = vmatprep.subr.mxu0 %v72
    %102 = vmatpush1.msra.mxu0 %v71
    %103 = vmatprep.subr.mxu0 %v69
    %104 = vmatpush1.msra.mxu0 %v68
    %105 = vmatprep.subr.mxu0 %v66
    %106 = vmatpush1.msra.mxu0 %v65
    %107 = vmatprep.subr.mxu0 %v63
    %108 = vmatpush1.msra.mxu0 %v62
    %109 = vmatprep.subr.mxu0 %v60
    %110 = vmatpush1.msra.mxu0 %v59
    %111 = vmatprep.subr.mxu0 %v57
    %112 = vmatpush1.msra.mxu0 %v56
    %113 = vmatprep.subr.mxu0 %v54
    %114 = vmatpush1.msra.mxu0 %v53
    %115 = vmatprep.subr.mxu0 %v51
    %116 = vmatpush1.msra.mxu0 %v50
    %117 = vmatprep.subr.mxu0 %v48
    %118 = vmatpush1.msra.mxu0 %v47
    %119 = vmatprep.subr.mxu0 %v45
    %120 = vmatpush1.msra.mxu0 %v44
    %121 = vmatprep.subr.mxu0 %v42
    %122 = vmatpush1.msra.mxu0 %v41
    %123 = vmatprep.subr.mxu0 %v39
    %124 = vmatpush1.msra.mxu0 %v38
    %125 = vmatprep.subr.mxu0 %v36
    %126 = vmatpush1.msra.mxu0 %v35
    %127 = vmatprep.subr.mxu0 %v33
    %128 = vmatpush1.msra.mxu0 %v32
    %129 = vmatprep.subr.mxu0 0.0
    %130 = vmatpush2.msra.mxu0 0.0
    %131 = vmatprep.subr.mxu0 0.0
    %132 = vmatpush2.msra.mxu0 0.0
    %133 = vmatprep.subr.mxu0 0.0
    %134 = vmatpush2.msra.mxu0 0.0
    %135 = vmatprep.subr.mxu0 0.0
    %136 = vmatpush2.msra.mxu0 0.0
    %137 = vmatprep.subr.mxu0 0.0
    %138 = vmatpush2.msra.mxu0 0.0
    %139 = vmatprep.subr.mxu0 0.0
    %140 = vmatpush2.msra.mxu0 0.0
    %141 = vmatprep.subr.mxu0 0.0
    %142 = vmatpush2.msra.mxu0 0.0
    %143 = vmatprep.subr.mxu0 0.0
    %144 = vmatpush2.msra.mxu0 0.0
    %145 = vmatprep.subr.mxu0 0.0
    %146 = vmatpush2.msra.mxu0 0.0
    %147 = vmatprep.subr.mxu0 0.0
    %148 = vmatpush2.msra.mxu0 0.0
    %149 = vmatprep.subr.mxu0 0.0
    %150 = vmatpush2.msra.mxu0 0.0
    %151 = vmatprep.subr.mxu0 0.0
    %152 = vmatpush2.msra.mxu0 0.0
    %153 = vmatprep.subr.mxu0 0.0
    %154 = vmatpush2.msra.mxu0 0.0
    %155 = vmatprep.subr.mxu0 0.0
    %156 = vmatpush2.msra.mxu0 0.0
    %157 = vmatprep.subr.mxu0 0.0
    %158 = vmatpush2.msra.mxu0 0.0
    %159 = vmatprep.subr.mxu0 0.0
    %160 = vmatpush2.msra.mxu0 0.0
    %161 = vmatprep.mubr.f32.mxu0 0.0
    %162 = vmatmul.mubr.f32.gmra.mxu0 %v28
    %v163 = vpop.f32.mrf.mxu0
    %v164 = vadd.f32 %v85, %v163
    %v165 = vpop.f32.mrf.mxu0
    %v166 = vadd.f32 %v89, %v165
    %167 = vmatprep.mubr.f32.mxu0 0.0
    %168 = vmatmul.mubr.f32.gmra.mxu0 %v29
    %v169 = vpop.f32.mrf.mxu0
    %v170 = vadd.f32 %v85, %v169
    %v171 = vpop.f32.mrf.mxu0
    %v172 = vadd.f32 %v89, %v171
    %173 = vmatprep.mubr.f32.mxu0 0.0
    %174 = vmatmul.mubr.f32.gmra.mxu0 %v30
    %v175 = vpop.f32.mrf.mxu0
    %v176 = vadd.f32 %v85, %v175
    %v177 = vpop.f32.mrf.mxu0
    %v178 = vadd.f32 %v89, %v177
    %179 = vmatprep.mubr.f32.mxu0 0.0
    %180 = vmatmul.mubr.f32.gmra.mxu0 %v31
    %v181 = vpop.f32.mrf.mxu0
    %v182 = vadd.f32 %v85, %v181
    %v183 = vpop.f32.mrf.mxu0
    %v184 = vadd.f32 %v89, %v183
    %185 = vdwg.mxu0
    %186 = vmatprep.subr.mxu0 0.0
    %187 = vmatpush1.msra.mxu0 %v79
    %188 = vmatprep.subr.mxu0 0.0
    %189 = vmatpush1.msra.mxu0 %v76
    %190 = vmatprep.subr.mxu0 0.0
    %191 = vmatpush1.msra.mxu0 %v73
    %192 = vmatprep.subr.mxu0 0.0
    %193 = vmatpush1.msra.mxu0 %v70
    %194 = vmatprep.subr.mxu0 0.0
    %195 = vmatpush1.msra.mxu0 %v67
    %196 = vmatprep.subr.mxu0 0.0
    %197 = vmatpush1.msra.mxu0 %v64
    %198 = vmatprep.subr.mxu0 0.0
    %199 = vmatpush1.msra.mxu0 %v61
    %200 = vmatprep.subr.mxu0 0.0
    %201 = vmatpush1.msra.mxu0 %v58
    %202 = vmatprep.subr.mxu0 0.0
    %203 = vmatpush1.msra.mxu0 %v55
    %204 = vmatprep.subr.mxu0 0.0
    %205 = vmatpush1.msra.mxu0 %v52
    %206 = vmatprep.subr.mxu0 0.0
    %207 = vmatpush1.msra.mxu0 %v49
    %208 = vmatprep.subr.mxu0 0.0
    %209 = vmatpush1.msra.mxu0 %v46
    %210 = vmatprep.subr.mxu0 0.0
    %211 = vmatpush1.msra.mxu0 %v43
    %212 = vmatprep.subr.mxu0 0.0
    %213 = vmatpush1.msra.mxu0 %v40
    %214 = vmatprep.subr.mxu0 0.0
    %215 = vmatpush1.msra.mxu0 %v37
    %216 = vmatprep.subr.mxu0 0.0
    %217 = vmatpush1.msra.mxu0 %v34
    %218 = vmatprep.subr.mxu0 0.0
    %219 = vmatpush2.msra.mxu0 0.0
    %220 = vmatprep.subr.mxu0 0.0
    %221 = vmatpush2.msra.mxu0 0.0
    %222 = vmatprep.subr.mxu0 0.0
    %223 = vmatpush2.msra.mxu0 0.0
    %224 = vmatprep.subr.mxu0 0.0
    %225 = vmatpush2.msra.mxu0 0.0
    %226 = vmatprep.subr.mxu0 0.0
    %227 = vmatpush2.msra.mxu0 0.0
    %228 = vmatprep.subr.mxu0 0.0
    %229 = vmatpush2.msra.mxu0 0.0
    %230 = vmatprep.subr.mxu0 0.0
    %231 = vmatpush2.msra.mxu0 0.0
    %232 = vmatprep.subr.mxu0 0.0
    %233 = vmatpush2.msra.mxu0 0.0
    %234 = vmatprep.subr.mxu0 0.0
    %235 = vmatpush2.msra.mxu0 0.0
    %236 = vmatprep.subr.mxu0 0.0
    %237 = vmatpush2.msra.mxu0 0.0
    %238 = vmatprep.subr.mxu0 0.0
    %239 = vmatpush2.msra.mxu0 0.0
    %240 = vmatprep.subr.mxu0 0.0
    %241 = vmatpush2.msra.mxu0 0.0
    %242 = vmatprep.subr.mxu0 0.0
    %243 = vmatpush2.msra.mxu0 0.0
    %244 = vmatprep.subr.mxu0 0.0
    %245 = vmatpush2.msra.mxu0 0.0
    %246 = vmatprep.subr.mxu0 0.0
    %247 = vmatpush2.msra.mxu0 0.0
    %248 = vmatprep.subr.mxu0 0.0
    %249 = vmatpush2.msra.mxu0 0.0
    %250 = vmatprep.mubr.f32.mxu0 0.0
    %251 = vmatmul.mubr.f32.gmra.mxu0 %v28
    %v252 = vpop.f32.mrf.mxu0
    %v253 = vadd.f32 %v93, %v252
    %v254 = vpop.f32.mrf.mxu0
    %255 = vmatprep.mubr.f32.mxu0 0.0
    %256 = vmatmul.mubr.f32.gmra.mxu0 %v29
    %v257 = vpop.f32.mrf.mxu0
    %v258 = vadd.f32 %v93, %v257
    %v259 = vpop.f32.mrf.mxu0
    %260 = vmatprep.mubr.f32.mxu0 0.0
    %261 = vmatmul.mubr.f32.gmra.mxu0 %v30
    %v262 = vpop.f32.mrf.mxu0
    %v263 = vadd.f32 %v93, %v262
    %v264 = vpop.f32.mrf.mxu0
    %265 = vmatprep.mubr.f32.mxu0 0.0
    %266 = vmatmul.mubr.f32.gmra.mxu0 %v31
    %v267 = vpop.f32.mrf.mxu0
    %v268 = vadd.f32 %v93, %v267
    %v269 = vpop.f32.mrf.mxu0
    %270 = vdwg.mxu0
    %271 = vst [vmem:[%s3] sm:$0xff] %v164
    %272 = vst [vmem:[%s3 + $0x8] sm:$0xff] %v166
    %273 = vst [vmem:[%s3 + $0x10] sm:$0xff] %v253
    %274 = vst [vmem:[%s3 + $0x18] sm:$0xff] %v170
    %275 = vst [vmem:[%s3 + $0x20] sm:$0xff] %v172
    %276 = vst [vmem:[%s3 + $0x28] sm:$0xff] %v258
    %277 = vst [vmem:[%s3 + $0x30] sm:$0xff] %v176
    %278 = vst [vmem:[%s3 + $0x38] sm:$0xff] %v178
    %279 = vst [vmem:[%s3 + $0x40] sm:$0xff] %v263
    %280 = vst [vmem:[%s3 + $0x48] sm:$0xff] %v182
    %281 = vst [vmem:[%s3 + $0x50] sm:$0xff] %v184
    %282 = vst [vmem:[%s3 + $0x58] sm:$0xff] %v268
    // Predicated region
    $region18: #{slam_forward.18} parent=1 // pred_check
      _
    $region19: #{slam_forward.18} parent=1 // pred_check_branch
      %284 = sbr.rel (0) target = $region21
    $region20: #{slam_forward.18} parent=1 // pred_region
      _
    $region21: #{slam_forward.18} parent=1 // pred_fallthru
      _
    // Predicated region
    $region22: #{slam_forward.18} parent=1 // pred_check
      _
    $region23: #{slam_forward.18} parent=1 // pred_check_branch
      %286 = sbr.rel (0) target = $region25
    $region24: #{slam_forward.18} parent=1 // pred_region
      _
    $region25: #{slam_forward.18} parent=1 // pred_fallthru
      _
    %287 = vsyncpa [#allocation3], 1

// kernel: slam_forward.21
$region0: #{slam_forward.21}
  #allocation0 [shape = 'u32[]', space=smem, size = 0x4, offset = 0x4, fixed_abs, tag = 'smem constant byte address 0x4 - core index']
  #allocation1 [shape = 'u32[144,128]{1,0:T(1,128)}', space=vmem, size = 0x12000, scoped, tag = 'internal scratch']
  %s0 = inlined_call_operand.vmem [shape: f32[32,128], index: 0, kind: input, shape index: {}]
  %s1 = inlined_call_operand.vmem [shape: f32[128,384], index: 1, kind: input, shape index: {}]
  %s2 = inlined_call_operand.vmem [shape: f32[1,384], index: 2, kind: input, shape index: {}]
  %s3 = inlined_call_operand.vmem [shape: f32[32,384], index: 3, kind: output, shape index: {}]
  %s4 = sld [smem:[#allocation0]]
  $region22: #{slam_forward.21} parent=0
    _
  %s6 = ssub.s32 1, %s4
  %s7 = scalar_select 0, %s6, %s4
  // Predicated region
  $region2: #{slam_forward.21} parent=0 // pred_check
    _
  $region3: #{slam_forward.21} parent=0 // pred_check_branch
    %9 = sbr.rel (0) target = $region5
  $region4: #{slam_forward.21} parent=0 // pred_region
    _
  $region5: #{slam_forward.21} parent=0 // pred_fallthru
    _
  // Predicated region
  $region6: #{slam_forward.21} parent=0 // pred_check
    _
  $region7: #{slam_forward.21} parent=0 // pred_check_branch
    %11 = sbr.rel (0) target = $region9
  $region8: #{slam_forward.21} parent=0 // pred_region
    _
  $region9: #{slam_forward.21} parent=0 // pred_fallthru
    _
  // Predicated region
  $region10: #{slam_forward.21} parent=0 // pred_check
    _
  $region11: #{slam_forward.21} parent=0 // pred_check_branch
    %13 = sbr.rel (0) target = $region13
  $region12: #{slam_forward.21} parent=0 // pred_region
    _
  $region13: #{slam_forward.21} parent=0 // pred_fallthru
    _
  %v14 = vld [vmem:[%s0] sm:$0xff]
  %v15 = vld [vmem:[%s0 + $0x8] sm:$0xff]
  %v16 = vld [vmem:[%s0 + $0x10] sm:$0xff]
  %v17 = vld [vmem:[%s0 + $0x18] sm:$0xff]
  %v18 = vld [vmem:[%s1] sm:$0xff]
  %v19 = vld [vmem:[%s1 + $0x8] sm:$0xff]
  %v20 = vld [vmem:[%s1 + $0x10] sm:$0xff]
  %v21 = vld [vmem:[%s1 + $0x18] sm:$0xff]
  %v22 = vld [vmem:[%s1 + $0x20] sm:$0xff]
  %v23 = vld [vmem:[%s1 + $0x28] sm:$0xff]
  %v24 = vld [vmem:[%s1 + $0x30] sm:$0xff]
  %v25 = vld [vmem:[%s1 + $0x38] sm:$0xff]
  %v26 = vld [vmem:[%s1 + $0x40] sm:$0xff]
  %v27 = vld [vmem:[%s1 + $0x48] sm:$0xff]
  %v28 = vld [vmem:[%s1 + $0x50] sm:$0xff]
  %v29 = vld [vmem:[%s1 + $0x58] sm:$0xff]
  %v30 = vld [vmem:[%s1 + $0x60] sm:$0xff]
  %v31 = vld [vmem:[%s1 + $0x68] sm:$0xff]
  %v32 = vld [vmem:[%s1 + $0x70] sm:$0xff]
  %v33 = vld [vmem:[%s1 + $0x78] sm:$0xff]
  %v34 = vld [vmem:[%s1 + $0x80] sm:$0xff]
  %v35 = vld [vmem:[%s1 + $0x88] sm:$0xff]
  %v36 = vld [vmem:[%s1 + $0x90] sm:$0xff]
  %v37 = vld [vmem:[%s1 + $0x98] sm:$0xff]
  %v38 = vld [vmem:[%s1 + $0xa0] sm:$0xff]
  %v39 = vld [vmem:[%s1 + $0xa8] sm:$0xff]
  %v40 = vld [vmem:[%s1 + $0xb0] sm:$0xff]
  %v41 = vld [vmem:[%s1 + $0xb8] sm:$0xff]
  %v42 = vld [vmem:[%s1 + $0xc0] sm:$0xff]
  %v43 = vld [vmem:[%s1 + $0xc8] sm:$0xff]
  %v44 = vld [vmem:[%s1 + $0xd0] sm:$0xff]
  %v45 = vld [vmem:[%s1 + $0xd8] sm:$0xff]
  %v46 = vld [vmem:[%s1 + $0xe0] sm:$0xff]
  %v47 = vld [vmem:[%s1 + $0xe8] sm:$0xff]
  %v48 = vld [vmem:[%s1 + $0xf0] sm:$0xff]
  %v49 = vld [vmem:[%s1 + $0xf8] sm:$0xff]
  %v50 = vld [vmem:[%s1 + $0x100] sm:$0xff]
  %v51 = vld [vmem:[%s1 + $0x108] sm:$0xff]
  %v52 = vld [vmem:[%s1 + $0x110] sm:$0xff]
  %v53 = vld [vmem:[%s1 + $0x118] sm:$0xff]
  %v54 = vld [vmem:[%s1 + $0x120] sm:$0xff]
  %v55 = vld [vmem:[%s1 + $0x128] sm:$0xff]
  %v56 = vld [vmem:[%s1 + $0x130] sm:$0xff]
  %v57 = vld [vmem:[%s1 + $0x138] sm:$0xff]
  %v58 = vld [vmem:[%s1 + $0x140] sm:$0xff]
  %v59 = vld [vmem:[%s1 + $0x148] sm:$0xff]
  %v60 = vld [vmem:[%s1 + $0x150] sm:$0xff]
  %v61 = vld [vmem:[%s1 + $0x158] sm:$0xff]
  %v62 = vld [vmem:[%s1 + $0x160] sm:$0xff]
  %v63 = vld [vmem:[%s1 + $0x168] sm:$0xff]
  %v64 = vld [vmem:[%s1 + $0x170] sm:$0xff]
  %v65 = vld [vmem:[%s1 + $0x178] sm:$0xff]
  %v66 = vld [vmem:[%s2] sm:$0x7]
  %v68 = vlaneseq
  %v69 = vshrl.u32 %v68, 7
  %v70 = vsub.s32 0, %v69
  %v71 = vrot.slane %v66, %v70
  %v72 = vlaneseq
  %v73 = vshrl.u32 %v72, 7
  %v74 = vsub.s32 1, %v73
  %v75 = vrot.slane %v66, %v74
  %v76 = vlaneseq
  %v77 = vshrl.u32 %v76, 7
  %v78 = vsub.s32 2, %v77
  %v79 = vrot.slane %v66, %v78
  %83 = vmatprep.subr.mxu0 %v64
  %84 = vmatpush1.msra.mxu0 %v63
  %85 = vmatprep.subr.mxu0 %v61
  %86 = vmatpush1.msra.mxu0 %v60
  %87 = vmatprep.subr.mxu0 %v58
  %88 = vmatpush1.msra.mxu0 %v57
  %89 = vmatprep.subr.mxu0 %v55
  %90 = vmatpush1.msra.mxu0 %v54
  %91 = vmatprep.subr.mxu0 %v52
  %92 = vmatpush1.msra.mxu0 %v51
  %93 = vmatprep.subr.mxu0 %v49
  %94 = vmatpush1.msra.mxu0 %v48
  %95 = vmatprep.subr.mxu0 %v46
  %96 = vmatpush1.msra.mxu0 %v45
  %97 = vmatprep.subr.mxu0 %v43
  %98 = vmatpush1.msra.mxu0 %v42
  %99 = vmatprep.subr.mxu0 %v40
  %100 = vmatpush1.msra.mxu0 %v39
  %101 = vmatprep.subr.mxu0 %v37
  %102 = vmatpush1.msra.mxu0 %v36
  %103 = vmatprep.subr.mxu0 %v34
  %104 = vmatpush1.msra.mxu0 %v33
  %105 = vmatprep.subr.mxu0 %v31
  %106 = vmatpush1.msra.mxu0 %v30
  %107 = vmatprep.subr.mxu0 %v28
  %108 = vmatpush1.msra.mxu0 %v27
  %109 = vmatprep.subr.mxu0 %v25
  %110 = vmatpush1.msra.mxu0 %v24
  %111 = vmatprep.subr.mxu0 %v22
  %112 = vmatpush1.msra.mxu0 %v21
  %113 = vmatprep.subr.mxu0 %v19
  %114 = vmatpush1.msra.mxu0 %v18
  %115 = vmatprep.subr.mxu0 0.0
  %116 = vmatpush2.msra.mxu0 0.0
  %117 = vmatprep.subr.mxu0 0.0
  %118 = vmatpush2.msra.mxu0 0.0
  %119 = vmatprep.subr.mxu0 0.0
  %120 = vmatpush2.msra.mxu0 0.0
  %121 = vmatprep.subr.mxu0 0.0
  %122 = vmatpush2.msra.mxu0 0.0
  %123 = vmatprep.subr.mxu0 0.0
  %124 = vmatpush2.msra.mxu0 0.0
  %125 = vmatprep.subr.mxu0 0.0
  %126 = vmatpush2.msra.mxu0 0.0
  %127 = vmatprep.subr.mxu0 0.0
  %128 = vmatpush2.msra.mxu0 0.0
  %129 = vmatprep.subr.mxu0 0.0
  %130 = vmatpush2.msra.mxu0 0.0
  %131 = vmatprep.subr.mxu0 0.0
  %132 = vmatpush2.msra.mxu0 0.0
  %133 = vmatprep.subr.mxu0 0.0
  %134 = vmatpush2.msra.mxu0 0.0
  %135 = vmatprep.subr.mxu0 0.0
  %136 = vmatpush2.msra.mxu0 0.0
  %137 = vmatprep.subr.mxu0 0.0
  %138 = vmatpush2.msra.mxu0 0.0
  %139 = vmatprep.subr.mxu0 0.0
  %140 = vmatpush2.msra.mxu0 0.0
  %141 = vmatprep.subr.mxu0 0.0
  %142 = vmatpush2.msra.mxu0 0.0
  %143 = vmatprep.subr.mxu0 0.0
  %144 = vmatpush2.msra.mxu0 0.0
  %145 = vmatprep.subr.mxu0 0.0
  %146 = vmatpush2.msra.mxu0 0.0
  %147 = vmatprep.mubr.f32.mxu0 0.0
  %148 = vmatmul.mubr.f32.gmra.mxu0 %v14
  %v149 = vpop.f32.mrf.mxu0
  %v150 = vadd.f32 %v71, %v149
  %v151 = vpop.f32.mrf.mxu0
  %v152 = vadd.f32 %v75, %v151
  %153 = vmatprep.mubr.f32.mxu0 0.0
  %154 = vmatmul.mubr.f32.gmra.mxu0 %v15
  %v155 = vpop.f32.mrf.mxu0
  %v156 = vadd.f32 %v71, %v155
  %v157 = vpop.f32.mrf.mxu0
  %v158 = vadd.f32 %v75, %v157
  %159 = vmatprep.mubr.f32.mxu0 0.0
  %160 = vmatmul.mubr.f32.gmra.mxu0 %v16
  %v161 = vpop.f32.mrf.mxu0
  %v162 = vadd.f32 %v71, %v161
  %v163 = vpop.f32.mrf.mxu0
  %v164 = vadd.f32 %v75, %v163
  %165 = vmatprep.mubr.f32.mxu0 0.0
  %166 = vmatmul.mubr.f32.gmra.mxu0 %v17
  %v167 = vpop.f32.mrf.mxu0
  %v168 = vadd.f32 %v71, %v167
  %v169 = vpop.f32.mrf.mxu0
  %v170 = vadd.f32 %v75, %v169
  %171 = vdwg.mxu0
  %172 = vmatprep.subr.mxu0 0.0
  %173 = vmatpush1.msra.mxu0 %v65
  %174 = vmatprep.subr.mxu0 0.0
  %175 = vmatpush1.msra.mxu0 %v62
  %176 = vmatprep.subr.mxu0 0.0
  %177 = vmatpush1.msra.mxu0 %v59
  %178 = vmatprep.subr.mxu0 0.0
  %179 = vmatpush1.msra.mxu0 %v56
  %180 = vmatprep.subr.mxu0 0.0
  %181 = vmatpush1.msra.mxu0 %v53
  %182 = vmatprep.subr.mxu0 0.0
  %183 = vmatpush1.msra.mxu0 %v50
  %184 = vmatprep.subr.mxu0 0.0
  %185 = vmatpush1.msra.mxu0 %v47
  %186 = vmatprep.subr.mxu0 0.0
  %187 = vmatpush1.msra.mxu0 %v44
  %188 = vmatprep.subr.mxu0 0.0
  %189 = vmatpush1.msra.mxu0 %v41
  %190 = vmatprep.subr.mxu0 0.0
  %191 = vmatpush1.msra.mxu0 %v38
  %192 = vmatprep.subr.mxu0 0.0
  %193 = vmatpush1.msra.mxu0 %v35
  %194 = vmatprep.subr.mxu0 0.0
  %195 = vmatpush1.msra.mxu0 %v32
  %196 = vmatprep.subr.mxu0 0.0
  %197 = vmatpush1.msra.mxu0 %v29
  %198 = vmatprep.subr.mxu0 0.0
  %199 = vmatpush1.msra.mxu0 %v26
  %200 = vmatprep.subr.mxu0 0.0
  %201 = vmatpush1.msra.mxu0 %v23
  %202 = vmatprep.subr.mxu0 0.0
  %203 = vmatpush1.msra.mxu0 %v20
  %204 = vmatprep.subr.mxu0 0.0
  %205 = vmatpush2.msra.mxu0 0.0
  %206 = vmatprep.subr.mxu0 0.0
  %207 = vmatpush2.msra.mxu0 0.0
  %208 = vmatprep.subr.mxu0 0.0
  %209 = vmatpush2.msra.mxu0 0.0
  %210 = vmatprep.subr.mxu0 0.0
  %211 = vmatpush2.msra.mxu0 0.0
  %212 = vmatprep.subr.mxu0 0.0
  %213 = vmatpush2.msra.mxu0 0.0
  %214 = vmatprep.subr.mxu0 0.0
  %215 = vmatpush2.msra.mxu0 0.0
  %216 = vmatprep.subr.mxu0 0.0
  %217 = vmatpush2.msra.mxu0 0.0
  %218 = vmatprep.subr.mxu0 0.0
  %219 = vmatpush2.msra.mxu0 0.0
  %220 = vmatprep.subr.mxu0 0.0
  %221 = vmatpush2.msra.mxu0 0.0
  %222 = vmatprep.subr.mxu0 0.0
  %223 = vmatpush2.msra.mxu0 0.0
  %224 = vmatprep.subr.mxu0 0.0
  %225 = vmatpush2.msra.mxu0 0.0
  %226 = vmatprep.subr.mxu0 0.0
  %227 = vmatpush2.msra.mxu0 0.0
  %228 = vmatprep.subr.mxu0 0.0
  %229 = vmatpush2.msra.mxu0 0.0
  %230 = vmatprep.subr.mxu0 0.0
  %231 = vmatpush2.msra.mxu0 0.0
  %232 = vmatprep.subr.mxu0 0.0
  %233 = vmatpush2.msra.mxu0 0.0
  %234 = vmatprep.subr.mxu0 0.0
  %235 = vmatpush2.msra.mxu0 0.0
  %236 = vmatprep.mubr.f32.mxu0 0.0
  %237 = vmatmul.mubr.f32.gmra.mxu0 %v14
  %v238 = vpop.f32.mrf.mxu0
  %v239 = vadd.f32 %v79, %v238
  %v240 = vpop.f32.mrf.mxu0
  %241 = vmatprep.mubr.f32.mxu0 0.0
  %242 = vmatmul.mubr.f32.gmra.mxu0 %v15
  %v243 = vpop.f32.mrf.mxu0
  %v244 = vadd.f32 %v79, %v243
  %v245 = vpop.f32.mrf.mxu0
  %246 = vmatprep.mubr.f32.mxu0 0.0
  %247 = vmatmul.mubr.f32.gmra.mxu0 %v16
  %v248 = vpop.f32.mrf.mxu0
  %v249 = vadd.f32 %v79, %v248
  %v250 = vpop.f32.mrf.mxu0
  %251 = vmatprep.mubr.f32.mxu0 0.0
  %252 = vmatmul.mubr.f32.gmra.mxu0 %v17
  %v253 = vpop.f32.mrf.mxu0
  %v254 = vadd.f32 %v79, %v253
  %v255 = vpop.f32.mrf.mxu0
  %256 = vdwg.mxu0
  %257 = vst [vmem:[%s3] sm:$0xff] %v150
  %258 = vst [vmem:[%s3 + $0x8] sm:$0xff] %v152
  %259 = vst [vmem:[%s3 + $0x10] sm:$0xff] %v239
  %260 = vst [vmem:[%s3 + $0x18] sm:$0xff] %v156
  %261 = vst [vmem:[%s3 + $0x20] sm:$0xff] %v158
  %262 = vst [vmem:[%s3 + $0x28] sm:$0xff] %v244
  %263 = vst [vmem:[%s3 + $0x30] sm:$0xff] %v162
  %264 = vst [vmem:[%s3 + $0x38] sm:$0xff] %v164
  %265 = vst [vmem:[%s3 + $0x40] sm:$0xff] %v249
  %266 = vst [vmem:[%s3 + $0x48] sm:$0xff] %v168
  %267 = vst [vmem:[%s3 + $0x50] sm:$0xff] %v170
  %268 = vst [vmem:[%s3 + $0x58] sm:$0xff] %v254
  // Predicated region
  $region14: #{slam_forward.21} parent=0 // pred_check
    _
  $region15: #{slam_forward.21} parent=0 // pred_check_branch
    %270 = sbr.rel (0) target = $region17
  $region16: #{slam_forward.21} parent=0 // pred_region
    _
  $region17: #{slam_forward.21} parent=0 // pred_fallthru
    _
  // Predicated region
  $region18: #{slam_forward.21} parent=0 // pred_check
    _
  $region19: #{slam_forward.21} parent=0 // pred_check_branch
    %272 = sbr.rel (0) target = $region21
  $region20: #{slam_forward.21} parent=0 // pred_region
    _
  $region21: #{slam_forward.21} parent=0 // pred_fallthru
    _

// kernel: slam_forward.20
$region0: #{slam_forward.20}
  #allocation0 [shape = 'u32[]', space=smem, size = 0x4, offset = 0x4, fixed_abs, tag = 'smem constant byte address 0x4 - core index']
  #allocation1 [shape = 'u32[144,128]{1,0:T(1,128)}', space=vmem, size = 0x12000, scoped, tag = 'internal scratch']
  #allocation2 [shape = 'f32[32,128]{1,0:T(8,128)}', space=vmem, size = 0x4000, scoped, tag = 'scratch operand']
  %s0 = inlined_call_operand.vmem [shape: f32[32,128], index: 0, kind: input, shape index: {}]
  %s1 = inlined_call_operand.vmem [shape: f32[128,1024], index: 1, kind: input, shape index: {}]
  %s2 = inlined_call_operand.vmem [shape: f32[1,1024], index: 2, kind: input, shape index: {}]
  %s3 = inlined_call_operand.vmem [shape: f32[1024,128], index: 3, kind: input, shape index: {}]
  %s4 = inlined_call_operand.vmem [shape: f32[1,128], index: 4, kind: input, shape index: {}]
  %s5 = inlined_call_operand.vmem [shape: f32[32,128], index: 5, kind: output, shape index: {}]
  %s6 = sld [smem:[#allocation0]]
  $region84: #{slam_forward.20} parent=0
    _
  %s8 = ssub.s32 1, %s6
  %s9 = scalar_select 0, %s8, %s6
  $region1: #{slam_forward.20} parent=0
    #allocation3 [shape = 'u8[524288]{0}', space=vmem, size = 0x80000, scoped, tag = 'input window, operand 1']
    loop: start=0, step=1, limit=4
    $region2: #{slam_forward.20} parent=1 // loop_pre_header
      _
    $region3: #{slam_forward.20} parent=1 // loop_header
      %s11 = sphi 0, %s15
      %p12 = scmp.ge.s32.totalorder %s11, 4
      %s18 = sphi 0, %s30
      %s19 = sphi 0, %s26
      %s20 = sphi 0, %s18
      %s21 = sphi 0, %s19
      %s22 = sphi 0, %s20
      %s23 = sphi 0, %s21
      %s33 = sphi 0, %s35
      %s36 = sphi 0, %s33
      %s37 = sphi 0, %s36
      %s53 = sphi 0, %s37
      %s59 = sphi 0, %s61
      %s62 = sphi 0, %s59
      %s63 = sphi 0, %s62
      %s79 = sphi 0, %s63
      %s85 = sphi 0, %s87
      %s88 = sphi 0, %s85
      %s89 = sphi 0, %s88
      %s105 = sphi 0, %s89
      %s111 = sphi 0, %s113
      %s114 = sphi 0, %s111
      %s115 = sphi 0, %s114
      %s131 = sphi 0, %s115
      %s135 = sphi 0, %s135
      %s137 = sphi 0, %s135
      %s138 = sphi 0, %s137
      %s152 = sphi 0, %s138
      %s158 = sphi 0, %s160
      %s161 = sphi 0, %s158
      %s162 = sphi 0, %s161
      %s178 = sphi 0, %s162
    $region4: #{slam_forward.20} parent=1 // loop_header_branch
      %14 = sbr.rel (%p12) target = $region8
    $region5: #{slam_forward.20} parent=1 // loop_body
      %s16 = ssub.s32 %s11, 1
      %s17 = ssub.s32 %s11, 2
      %s24 = sadd.s32 1, %s19
      %p25 = scmp.ge.s32.totalorder %s24, 2
      %s26 = scalar_select %p25, 0, %s24
      %s27 = sadd.s32 1, %s18
      %s28 = scalar_select %p25, %s27, %s18
      %p29 = scmp.ge.s32.totalorder %s28, 1
      %s30 = scalar_select %p29, 0, %s28
      %s31 = ssub.s32 %s18, %s30
      %p32 = scmp.eq.s32.totalorder %s31, 0
      %s34 = sadd.s32 %s33, 1
      %s35 = scalar_select %p32, %s33, %s34
      %p38 = pneg %p32
      %p39 = scmp.eq.s32.totalorder %s11, 1
      %p40 = por %p38, %p39
      %p41 = scmp.ne.s32.totalorder %s33, %s36
      %p42 = scmp.eq.s32.totalorder %s11, 0
      %p43 = por %p41, %p42
      %p44 = scmp.ne.s32.totalorder %s33, %s36
      %p45 = scmp.eq.s32.totalorder %s16, 1
      %p46 = por %p44, %p45
      %p47 = scmp.ne.s32.totalorder %s36, %s37
      %p48 = scmp.eq.s32.totalorder %s16, 0
      %p49 = por %p47, %p48
      %p50 = scmp.ne.s32.totalorder %s36, %s37
      %p51 = scmp.eq.s32.totalorder %s17, 1
      %p52 = por %p50, %p51
      %p54 = scmp.ne.s32.totalorder %s37, %s53
      %p55 = scmp.eq.s32.totalorder %s17, 0
      %p56 = por %p54, %p55
      %s57 = ssub.s32 %s19, %s26
      %p58 = scmp.eq.s32.totalorder %s57, 0
      %s60 = sadd.s32 %s59, 1
      %s61 = scalar_select %p58, %s59, %s60
      %p64 = pneg %p58
      %p65 = scmp.eq.s32.totalorder %s11, 1
      %p66 = por %p64, %p65
      %p67 = scmp.ne.s32.totalorder %s59, %s62
      %p68 = scmp.eq.s32.totalorder %s11, 0
      %p69 = por %p67, %p68
      %p70 = scmp.ne.s32.totalorder %s59, %s62
      %p71 = scmp.eq.s32.totalorder %s16, 1
      %p72 = por %p70, %p71
      %p73 = scmp.ne.s32.totalorder %s62, %s63
      %p74 = scmp.eq.s32.totalorder %s16, 0
      %p75 = por %p73, %p74
      %p76 = scmp.ne.s32.totalorder %s62, %s63
      %p77 = scmp.eq.s32.totalorder %s17, 1
      %p78 = por %p76, %p77
      %p80 = scmp.ne.s32.totalorder %s63, %s79
      %p81 = scmp.eq.s32.totalorder %s17, 0
      %p82 = por %p80, %p81
      %s83 = ssub.s32 %s19, %s26
      %p84 = scmp.eq.s32.totalorder %s83, 0
      %s86 = sadd.s32 %s85, 1
      %s87 = scalar_select %p84, %s85, %s86
      %p90 = pneg %p84
      %p91 = scmp.eq.s32.totalorder %s11, 1
      %p92 = por %p90, %p91
      %p93 = scmp.ne.s32.totalorder %s85, %s88
      %p94 = scmp.eq.s32.totalorder %s11, 0
      %p95 = por %p93, %p94
      %p96 = scmp.ne.s32.totalorder %s85, %s88
      %p97 = scmp.eq.s32.totalorder %s16, 1
      %p98 = por %p96, %p97
      %p99 = scmp.ne.s32.totalorder %s88, %s89
      %p100 = scmp.eq.s32.totalorder %s16, 0
      %p101 = por %p99, %p100
      %p102 = scmp.ne.s32.totalorder %s88, %s89
      %p103 = scmp.eq.s32.totalorder %s17, 1
      %p104 = por %p102, %p103
      %p106 = scmp.ne.s32.totalorder %s89, %s105
      %p107 = scmp.eq.s32.totalorder %s17, 0
      %p108 = por %p106, %p107
      %s109 = ssub.s32 %s19, %s26
      %p110 = scmp.eq.s32.totalorder %s109, 0
      %s112 = sadd.s32 %s111, 1
      %s113 = scalar_select %p110, %s111, %s112
      %p116 = pneg %p110
      %p117 = scmp.eq.s32.totalorder %s11, 1
      %p118 = por %p116, %p117
      %p119 = scmp.ne.s32.totalorder %s111, %s114
      %p120 = scmp.eq.s32.totalorder %s11, 0
      %p121 = por %p119, %p120
      %p122 = scmp.ne.s32.totalorder %s111, %s114
      %p123 = scmp.eq.s32.totalorder %s16, 1
      %p124 = por %p122, %p123
      %p125 = scmp.ne.s32.totalorder %s114, %s115
      %p126 = scmp.eq.s32.totalorder %s16, 0
      %p127 = por %p125, %p126
      %p128 = scmp.ne.s32.totalorder %s114, %s115
      %p129 = scmp.eq.s32.totalorder %s17, 1
      %p130 = por %p128, %p129
      %p132 = scmp.ne.s32.totalorder %s115, %s131
      %p133 = scmp.eq.s32.totalorder %s17, 0
      %p134 = por %p132, %p133
      %s136 = sadd.s32 %s135, 1
      %p139 = scmp.eq.s32.totalorder %s11, 1
      %p140 = scmp.ne.s32.totalorder %s135, %s137
      %p141 = scmp.eq.s32.totalorder %s11, 0
      %p142 = por %p140, %p141
      %p143 = scmp.ne.s32.totalorder %s135, %s137
      %p144 = scmp.eq.s32.totalorder %s16, 1
      %p145 = por %p143, %p144
      %p146 = scmp.ne.s32.totalorder %s137, %s138
      %p147 = scmp.eq.s32.totalorder %s16, 0
      %p148 = por %p146, %p147
      %p149 = scmp.ne.s32.totalorder %s137, %s138
      %p150 = scmp.eq.s32.totalorder %s17, 1
      %p151 = por %p149, %p150
      %p153 = scmp.ne.s32.totalorder %s138, %s152
      %p154 = scmp.eq.s32.totalorder %s17, 0
      %p155 = por %p153, %p154
      %s156 = ssub.s32 %s18, %s30
      %p157 = scmp.eq.s32.totalorder %s156, 0
      %s159 = sadd.s32 %s158, 1
      %s160 = scalar_select %p157, %s158, %s159
      %p163 = pneg %p157
      %p164 = scmp.eq.s32.totalorder %s11, 1
      %p165 = por %p163, %p164
      %p166 = scmp.ne.s32.totalorder %s158, %s161
      %p167 = scmp.eq.s32.totalorder %s11, 0
      %p168 = por %p166, %p167
      %p169 = scmp.ne.s32.totalorder %s158, %s161
      %p170 = scmp.eq.s32.totalorder %s16, 1
      %p171 = por %p169, %p170
      %p172 = scmp.ne.s32.totalorder %s161, %s162
      %p173 = scmp.eq.s32.totalorder %s16, 0
      %p174 = por %p172, %p173
      %p175 = scmp.ne.s32.totalorder %s161, %s162
      %p176 = scmp.eq.s32.totalorder %s17, 1
      %p177 = por %p175, %p176
      %p179 = scmp.ne.s32.totalorder %s162, %s178
      %p180 = scmp.eq.s32.totalorder %s17, 0
      %p181 = por %p179, %p180
      %p182 = scmp.le.s32.totalorder 1, %s11
      %p183 = scmp.lt.s32.totalorder %s11, 3
      %p184 = pnand %p182, %p183
      %p185 = pneg %p184
      // Predicated region
      $region9: #{slam_forward.20} parent=5 // pred_check
        _
      $region10: #{slam_forward.20} parent=5 // pred_check_branch
        %187 = sbr.rel (%p184) target = $region12
      $region11: #{slam_forward.20} parent=5 // pred_region
        %s188 = ssub.s32 %s11, 1
        // Predicated region
        $region13: #{slam_forward.20} parent=11 // pred_check
          %p189 = pneg %p49
        $region14: #{slam_forward.20} parent=11 // pred_check_branch
          %191 = sbr.rel (%p189) target = $region16
        $region15: #{slam_forward.20} parent=11 // pred_region
          %s192 = smul.u32 4, %s20
          %p193 = scmp.lt.s32.totalorder %s192, 3
          %s194 = scalar_select %p193, %s192, 3
          %s195 = smul.addr %s194, 8
          %s196 = scalar_lea.vmem %s0, %s195
          %s197 = smul.u32 4, %s20
        $region16: #{slam_forward.20} parent=11 // pred_fallthru
          _
        // Predicated region
        $region17: #{slam_forward.20} parent=11 // pred_check
          %p198 = pneg %p148
        $region18: #{slam_forward.20} parent=11 // pred_check_branch
          %200 = sbr.rel (%p198) target = $region20
        $region19: #{slam_forward.20} parent=11 // pred_region
          _
        $region20: #{slam_forward.20} parent=11 // pred_fallthru
          _
      $region12: #{slam_forward.20} parent=5 // pred_fallthru
        _
      %p201 = scmp.lt.s32.totalorder %s11, 2
      // Predicated region
      $region21: #{slam_forward.20} parent=5 // pred_check
        %p202 = pneg %p201
      $region22: #{slam_forward.20} parent=5 // pred_check_branch
        %204 = sbr.rel (%p202) target = $region24
      $region23: #{slam_forward.20} parent=5 // pred_region
        // Predicated region
        $region25: #{slam_forward.20} parent=23 // pred_check
          %p205 = pneg %p69
        $region26: #{slam_forward.20} parent=23 // pred_check_branch
          %207 = sbr.rel (%p205) target = $region28
        $region27: #{slam_forward.20} parent=23 // pred_region
          %s208 = sand.u32 %s59, 1
          %s209 = sand.u32 %s59, 1
          %s210 = smul.addr %s209, 512
          %s211 = scalar_lea.vmem [#allocation3], %s210
          %s212 = smul.u32 4, %s19
          %s213 = smul.addr %s212, 8
          %s214 = scalar_lea.vmem %s1, %s213
          // Predicated region
          $region29: #{slam_forward.20} parent=27 // pred_check
            _
          $region30: #{slam_forward.20} parent=27 // pred_check_branch
            %216 = sbr.rel (0) target = $region32
          $region31: #{slam_forward.20} parent=27 // pred_region
            // Predicated region
            $region33: #{slam_forward.20} parent=31 // pred_check
              _
            $region34: #{slam_forward.20} parent=31 // pred_check_branch
              %218 = sbr.rel (0) target = $region36
            $region35: #{slam_forward.20} parent=31 // pred_region
              loop: start=0, step=1, limit=1
              $region37: #{slam_forward.20} parent=35 // loop_pre_header
                _
              $region38: #{slam_forward.20} parent=35 // loop_header
                %s220 = sphi 0, %s224
                %p221 = scmp.ge.s32.totalorder %s220, 1
                %s225 = sphi %s214, %s214
                %s226 = sphi %s211, %s211
              $region39: #{slam_forward.20} parent=35 // loop_header_branch
                %223 = sbr.rel (%p221) target = $region43
              $region40: #{slam_forward.20} parent=35 // loop_body
                %v227 = vld [vmem:[%s225] sm:$0xff]
                %228 = vst [vmem:[%s226] sm:$0xff] %v227
                %v229 = vld [vmem:[%s225 + $0x8] sm:$0xff]
                %230 = vst [vmem:[%s226 + $0x8] sm:$0xff] %v229
                %v231 = vld [vmem:[%s225 + $0x10] sm:$0xff]
                %232 = vst [vmem:[%s226 + $0x10] sm:$0xff] %v231
                %v233 = vld [vmem:[%s225 + $0x18] sm:$0xff]
                %234 = vst [vmem:[%s226 + $0x18] sm:$0xff] %v233
                %v235 = vld [vmem:[%s225 + $0x40] sm:$0xff]
                %236 = vst [vmem:[%s226 + $0x20] sm:$0xff] %v235
                %v237 = vld [vmem:[%s225 + $0x48] sm:$0xff]
                %238 = vst [vmem:[%s226 + $0x28] sm:$0xff] %v237
                %v239 = vld [vmem:[%s225 + $0x50] sm:$0xff]
                %240 = vst [vmem:[%s226 + $0x30] sm:$0xff] %v239
                %v241 = vld [vmem:[%s225 + $0x58] sm:$0xff]
                %242 = vst [vmem:[%s226 + $0x38] sm:$0xff] %v241
                %v243 = vld [vmem:[%s225 + $0x80] sm:$0xff]
                %244 = vst [vmem:[%s226 + $0x40] sm:$0xff] %v243
                %v245 = vld [vmem:[%s225 + $0x88] sm:$0xff]
                %246 = vst [vmem:[%s226 + $0x48] sm:$0xff] %v245
                %v247 = vld [vmem:[%s225 + $0x90] sm:$0xff]
                %248 = vst [vmem:[%s226 + $0x50] sm:$0xff] %v247
                %v249 = vld [vmem:[%s225 + $0x98] sm:$0xff]
                %250 = vst [vmem:[%s226 + $0x58] sm:$0xff] %v249
                %v251 = vld [vmem:[%s225 + $0xc0] sm:$0xff]
                %252 = vst [vmem:[%s226 + $0x60] sm:$0xff] %v251
                %v253 = vld [vmem:[%s225 + $0xc8] sm:$0xff]
                %254 = vst [vmem:[%s226 + $0x68] sm:$0xff] %v253
                %v255 = vld [vmem:[%s225 + $0xd0] sm:$0xff]
                %256 = vst [vmem:[%s226 + $0x70] sm:$0xff] %v255
                %v257 = vld [vmem:[%s225 + $0xd8] sm:$0xff]
                %258 = vst [vmem:[%s226 + $0x78] sm:$0xff] %v257
                %v259 = vld [vmem:[%s225 + $0x100] sm:$0xff]
                %260 = vst [vmem:[%s226 + $0x80] sm:$0xff] %v259
                %v261 = vld [vmem:[%s225 + $0x108] sm:$0xff]
                %262 = vst [vmem:[%s226 + $0x88] sm:$0xff] %v261
                %v263 = vld [vmem:[%s225 + $0x110] sm:$0xff]
                %264 = vst [vmem:[%s226 + $0x90] sm:$0xff] %v263
                %v265 = vld [vmem:[%s225 + $0x118] sm:$0xff]
                %266 = vst [vmem:[%s226 + $0x98] sm:$0xff] %v265
                %v267 = vld [vmem:[%s225 + $0x140] sm:$0xff]
                %268 = vst [vmem:[%s226 + $0xa0] sm:$0xff] %v267
                %v269 = vld [vmem:[%s225 + $0x148] sm:$0xff]
                %270 = vst [vmem:[%s226 + $0xa8] sm:$0xff] %v269
                %v271 = vld [vmem:[%s225 + $0x150] sm:$0xff]
                %272 = vst [vmem:[%s226 + $0xb0] sm:$0xff] %v271
                %v273 = vld [vmem:[%s225 + $0x158] sm:$0xff]
                %274 = vst [vmem:[%s226 + $0xb8] sm:$0xff] %v273
                %v275 = vld [vmem:[%s225 + $0x180] sm:$0xff]
                %276 = vst [vmem:[%s226 + $0xc0] sm:$0xff] %v275
                %v277 = vld [vmem:[%s225 + $0x188] sm:$0xff]
                %278 = vst [vmem:[%s226 + $0xc8] sm:$0xff] %v277
                %v279 = vld [vmem:[%s225 + $0x190] sm:$0xff]
                %280 = vst [vmem:[%s226 + $0xd0] sm:$0xff] %v279
                %v281 = vld [vmem:[%s225 + $0x198] sm:$0xff]
                %282 = vst [vmem:[%s226 + $0xd8] sm:$0xff] %v281
                %v283 = vld [vmem:[%s225 + $0x1c0] sm:$0xff]
                %284 = vst [vmem:[%s226 + $0xe0] sm:$0xff] %v283
                %v285 = vld [vmem:[%s225 + $0x1c8] sm:$0xff]
                %286 = vst [vmem:[%s226 + $0xe8] sm:$0xff] %v285
                %v287 = vld [vmem:[%s225 + $0x1d0] sm:$0xff]
                %288 = vst [vmem:[%s226 + $0xf0] sm:$0xff] %v287
                %v289 = vld [vmem:[%s225 + $0x1d8] sm:$0xff]
                %290 = vst [vmem:[%s226 + $0xf8] sm:$0xff] %v289
                %v291 = vld [vmem:[%s225 + $0x200] sm:$0xff]
                %292 = vst [vmem:[%s226 + $0x100] sm:$0xff] %v291
                %v293 = vld [vmem:[%s225 + $0x208] sm:$0xff]
                %294 = vst [vmem:[%s226 + $0x108] sm:$0xff] %v293
                %v295 = vld [vmem:[%s225 + $0x210] sm:$0xff]
                %296 = vst [vmem:[%s226 + $0x110] sm:$0xff] %v295
                %v297 = vld [vmem:[%s225 + $0x218] sm:$0xff]
                %298 = vst [vmem:[%s226 + $0x118] sm:$0xff] %v297
                %v299 = vld [vmem:[%s225 + $0x240] sm:$0xff]
                %300 = vst [vmem:[%s226 + $0x120] sm:$0xff] %v299
                %v301 = vld [vmem:[%s225 + $0x248] sm:$0xff]
                %302 = vst [vmem:[%s226 + $0x128] sm:$0xff] %v301
                %v303 = vld [vmem:[%s225 + $0x250] sm:$0xff]
                %304 = vst [vmem:[%s226 + $0x130] sm:$0xff] %v303
                %v305 = vld [vmem:[%s225 + $0x258] sm:$0xff]
                %306 = vst [vmem:[%s226 + $0x138] sm:$0xff] %v305
                %v307 = vld [vmem:[%s225 + $0x280] sm:$0xff]
                %308 = vst [vmem:[%s226 + $0x140] sm:$0xff] %v307
                %v309 = vld [vmem:[%s225 + $0x288] sm:$0xff]
                %310 = vst [vmem:[%s226 + $0x148] sm:$0xff] %v309
                %v311 = vld [vmem:[%s225 + $0x290] sm:$0xff]
                %312 = vst [vmem:[%s226 + $0x150] sm:$0xff] %v311
                %v313 = vld [vmem:[%s225 + $0x298] sm:$0xff]
                %314 = vst [vmem:[%s226 + $0x158] sm:$0xff] %v313
                %v315 = vld [vmem:[%s225 + $0x2c0] sm:$0xff]
                %316 = vst [vmem:[%s226 + $0x160] sm:$0xff] %v315
                %v317 = vld [vmem:[%s225 + $0x2c8] sm:$0xff]
                %318 = vst [vmem:[%s226 + $0x168] sm:$0xff] %v317
                %v319 = vld [vmem:[%s225 + $0x2d0] sm:$0xff]
                %320 = vst [vmem:[%s226 + $0x170] sm:$0xff] %v319
                %v321 = vld [vmem:[%s225 + $0x2d8] sm:$0xff]
                %322 = vst [vmem:[%s226 + $0x178] sm:$0xff] %v321
                %v323 = vld [vmem:[%s225 + $0x300] sm:$0xff]
                %324 = vst [vmem:[%s226 + $0x180] sm:$0xff] %v323
                %v325 = vld [vmem:[%s225 + $0x308] sm:$0xff]
                %326 = vst [vmem:[%s226 + $0x188] sm:$0xff] %v325
                %v327 = vld [vmem:[%s225 + $0x310] sm:$0xff]
                %328 = vst [vmem:[%s226 + $0x190] sm:$0xff] %v327
                %v329 = vld [vmem:[%s225 + $0x318] sm:$0xff]
                %330 = vst [vmem:[%s226 + $0x198] sm:$0xff] %v329
                %v331 = vld [vmem:[%s225 + $0x340] sm:$0xff]
                %332 = vst [vmem:[%s226 + $0x1a0] sm:$0xff] %v331
                %v333 = vld [vmem:[%s225 + $0x348] sm:$0xff]
                %334 = vst [vmem:[%s226 + $0x1a8] sm:$0xff] %v333
                %v335 = vld [vmem:[%s225 + $0x350] sm:$0xff]
                %336 = vst [vmem:[%s226 + $0x1b0] sm:$0xff] %v335
                %v337 = vld [vmem:[%s225 + $0x358] sm:$0xff]
                %338 = vst [vmem:[%s226 + $0x1b8] sm:$0xff] %v337
                %v339 = vld [vmem:[%s225 + $0x380] sm:$0xff]
                %340 = vst [vmem:[%s226 + $0x1c0] sm:$0xff] %v339
                %v341 = vld [vmem:[%s225 + $0x388] sm:$0xff]
                %342 = vst [vmem:[%s226 + $0x1c8] sm:$0xff] %v341
                %v343 = vld [vmem:[%s225 + $0x390] sm:$0xff]
                %344 = vst [vmem:[%s226 + $0x1d0] sm:$0xff] %v343
                %v345 = vld [vmem:[%s225 + $0x398] sm:$0xff]
                %346 = vst [vmem:[%s226 + $0x1d8] sm:$0xff] %v345
                %v347 = vld [vmem:[%s225 + $0x3c0] sm:$0xff]
                %348 = vst [vmem:[%s226 + $0x1e0] sm:$0xff] %v347
                %v349 = vld [vmem:[%s225 + $0x3c8] sm:$0xff]
                %350 = vst [vmem:[%s226 + $0x1e8] sm:$0xff] %v349
                %v351 = vld [vmem:[%s225 + $0x3d0] sm:$0xff]
                %352 = vst [vmem:[%s226 + $0x1f0] sm:$0xff] %v351
                %v353 = vld [vmem:[%s225 + $0x3d8] sm:$0xff]
                %354 = vst [vmem:[%s226 + $0x1f8] sm:$0xff] %v353
              $region41: #{slam_forward.20} parent=35 // loop_footer
                %s224 = sadd.s32 1, %s220
              $region42: #{slam_forward.20} parent=35 // loop_footer_branch
                %219 = sbr.rel target = $region38
              $region43: #{slam_forward.20} parent=35 // loop_exit
                _
            $region36: #{slam_forward.20} parent=31 // pred_fallthru
              _
            // Predicated region
            $region44: #{slam_forward.20} parent=31 // pred_check
              _
            $region45: #{slam_forward.20} parent=31 // pred_check_branch
              %356 = sbr.rel target = $region47
            $region46: #{slam_forward.20} parent=31 // pred_region
              _
            $region47: #{slam_forward.20} parent=31 // pred_fallthru
              _
          $region32: #{slam_forward.20} parent=27 // pred_fallthru
            _
          %357 = vnop
        $region28: #{slam_forward.20} parent=23 // pred_fallthru
          _
        // Predicated region
        $region48: #{slam_forward.20} parent=23 // pred_check
          %p358 = pneg %p95
        $region49: #{slam_forward.20} parent=23 // pred_check_branch
          %360 = sbr.rel (%p358) target = $region51
        $region50: #{slam_forward.20} parent=23 // pred_region
          %s361 = smul.u32 4, %s19
          %p362 = scmp.lt.s32.totalorder %s361, 7
          %s363 = scalar_select %p362, %s361, 7
          %s364 = scalar_lea.vmem %s2, %s363
          %s365 = smul.u32 4, %s19
        $region51: #{slam_forward.20} parent=23 // pred_fallthru
          _
        // Predicated region
        $region52: #{slam_forward.20} parent=23 // pred_check
          %p366 = pneg %p121
        $region53: #{slam_forward.20} parent=23 // pred_check_branch
          %368 = sbr.rel (%p366) target = $region55
        $region54: #{slam_forward.20} parent=23 // pred_region
          %s369 = smul.u32 64, %s19
          %p370 = scmp.lt.s32.totalorder %s369, 127
          %s371 = scalar_select %p370, %s369, 127
          %s372 = smul.addr %s371, 8
          %s373 = scalar_lea.vmem %s3, %s372
          %s374 = smul.u32 64, %s19
        $region55: #{slam_forward.20} parent=23 // pred_fallthru
          _
      $region24: #{slam_forward.20} parent=5 // pred_fallthru
        _
      %p375 = scmp.le.s32.totalorder 1, %s11
      %p376 = scmp.lt.s32.totalorder %s11, 3
      %p377 = pnand %p375, %p376
      %p378 = pneg %p377
      // Predicated region
      $region56: #{slam_forward.20} parent=5 // pred_check
        _
      $region57: #{slam_forward.20} parent=5 // pred_check_branch
        %380 = sbr.rel (%p377) target = $region59
      $region58: #{slam_forward.20} parent=5 // pred_region
        %s381 = ssub.s32 %s11, 1
        %s382 = sand.u32 %s62, 1
        %s383 = sand.u32 %s62, 1
        %s384 = smul.addr %s383, 512
        %s385 = scalar_lea.vmem [#allocation3], %s384
        // Predicated region
        $region60: #{slam_forward.20} parent=58 // pred_check
          %p386 = pneg %p75
        $region61: #{slam_forward.20} parent=58 // pred_check_branch
          %388 = sbr.rel (%p386) target = $region63
        $region62: #{slam_forward.20} parent=58 // pred_region
          _
        $region63: #{slam_forward.20} parent=58 // pred_fallthru
          _
        %s389 = smul.u32 4, %s20
        %p390 = scmp.lt.s32.totalorder %s389, 3
        %s391 = scalar_select %p390, %s389, 3
        %s392 = smul.addr %s391, 8
        %s393 = scalar_lea.vmem %s0, %s392
        %p394 = pneg %p49
        %p395 = pneg %p46
        %s396 = sand.u32 %s62, 1
        %s397 = sand.u32 %s62, 1
        %s398 = smul.addr %s397, 512
        %s399 = scalar_lea.vmem [#allocation3], %s398
        %p400 = pneg %p75
        %p401 = pneg %p72
        %s402 = smul.u32 4, %s21
        %p403 = scmp.lt.s32.totalorder %s402, 7
        %s404 = scalar_select %p403, %s402, 7
        %s405 = scalar_lea.vmem %s2, %s404
        %p406 = pneg %p101
        %p407 = pneg %p98
        %s408 = smul.u32 64, %s21
        %p409 = scmp.lt.s32.totalorder %s408, 127
        %s410 = scalar_select %p409, %s408, 127
        %s411 = smul.addr %s410, 8
        %s412 = scalar_lea.vmem %s3, %s411
        %p413 = pneg %p127
        %p414 = pneg %p124
        %p415 = pneg %p148
        %p416 = pneg %p145
        %p417 = pneg %p174
        %p418 = pneg %p171
        %s419 = smul.u32 4, %s20
        %p420 = scmp.lt.s32.totalorder %s419, 3
        %s421 = scalar_select %p420, %s419, 3
        %s422 = smul.addr %s421, 8
        %s423 = scalar_lea.vmem %s5, %s422
        %s424 = smul.u32 4, %s20
        %p425 = scmp.lt.s32.totalorder %s424, 3
        %s426 = scalar_select %p425, %s424, 3
        %s427 = smul.addr %s426, 8
        %s428 = scalar_lea.vmem %s0, %s427
        %s429 = smul.u32 4, %s20
        %s430 = smul.u32 4, %s21
        %s431 = smul.u32 4, %s21
        %p432 = scmp.lt.s32.totalorder %s431, 7
        %s433 = scalar_select %p432, %s431, 7
        %s434 = scalar_lea.vmem %s2, %s433
        %s435 = smul.u32 4, %s21
        %s436 = smul.u32 64, %s21
        %p437 = scmp.lt.s32.totalorder %s436, 127
        %s438 = scalar_select %p437, %s436, 127
        %s439 = smul.addr %s438, 8
        %s440 = scalar_lea.vmem %s3, %s439
        %s441 = smul.u32 64, %s21
        %s442 = smul.u32 4, %s20
        %p443 = scmp.lt.s32.totalorder %s442, 3
        %s444 = scalar_select %p443, %s442, 3
        %s445 = smul.addr %s444, 8
        %s446 = scalar_lea.vmem %s5, %s445
        %s447 = smul.u32 4, %s20
        %p448 = scmp.eq.s32.totalorder %s21, 0
        // Predicated region
        $region64: #{slam_forward.20} parent=58 // pred_check
          %p449 = pneg %p448
        $region65: #{slam_forward.20} parent=58 // pred_check_branch
          %451 = sbr.rel (%p449) target = $region67
        $region66: #{slam_forward.20} parent=58 // pred_region
          %452 = vst [vmem:[#allocation2] sm:$0xff] 0.0
          %453 = vst [vmem:[#allocation2 + $0x8] sm:$0xff] 0.0
          %454 = vst [vmem:[#allocation2 + $0x10] sm:$0xff] 0.0
          %455 = vst [vmem:[#allocation2 + $0x18] sm:$0xff] 0.0
        $region67: #{slam_forward.20} parent=58 // pred_fallthru
          _
        %v456 = vld [vmem:[%s428] sm:$0xff]
        %v457 = vld [vmem:[%s428 + $0x8] sm:$0xff]
        %v458 = vld [vmem:[%s428 + $0x10] sm:$0xff]
        %v459 = vld [vmem:[%s428 + $0x18] sm:$0xff]
        %v460 = vld [vmem:[%s385] sm:$0xff]
        %v461 = vld [vmem:[%s385 + $0x8] sm:$0xff]
        %v462 = vld [vmem:[%s385 + $0x10] sm:$0xff]
        %v463 = vld [vmem:[%s385 + $0x18] sm:$0xff]
        %v464 = vld [vmem:[%s385 + $0x20] sm:$0xff]
        %v465 = vld [vmem:[%s385 + $0x28] sm:$0xff]
        %v466 = vld [vmem:[%s385 + $0x30] sm:$0xff]
        %v467 = vld [vmem:[%s385 + $0x38] sm:$0xff]
        %v468 = vld [vmem:[%s385 + $0x40] sm:$0xff]
        %v469 = vld [vmem:[%s385 + $0x48] sm:$0xff]
        %v470 = vld [vmem:[%s385 + $0x50] sm:$0xff]
        %v471 = vld [vmem:[%s385 + $0x58] sm:$0xff]
        %v472 = vld [vmem:[%s385 + $0x60] sm:$0xff]
        %v473 = vld [vmem:[%s385 + $0x68] sm:$0xff]
        %v474 = vld [vmem:[%s385 + $0x70] sm:$0xff]
        %v475 = vld [vmem:[%s385 + $0x78] sm:$0xff]
        %v476 = vld [vmem:[%s385 + $0x80] sm:$0xff]
        %v477 = vld [vmem:[%s385 + $0x88] sm:$0xff]
        %v478 = vld [vmem:[%s385 + $0x90] sm:$0xff]
        %v479 = vld [vmem:[%s385 + $0x98] sm:$0xff]
        %v480 = vld [vmem:[%s385 + $0xa0] sm:$0xff]
        %v481 = vld [vmem:[%s385 + $0xa8] sm:$0xff]
        %v482 = vld [vmem:[%s385 + $0xb0] sm:$0xff]
        %v483 = vld [vmem:[%s385 + $0xb8] sm:$0xff]
        %v484 = vld [vmem:[%s385 + $0xc0] sm:$0xff]
        %v485 = vld [vmem:[%s385 + $0xc8] sm:$0xff]
        %v486 = vld [vmem:[%s385 + $0xd0] sm:$0xff]
        %v487 = vld [vmem:[%s385 + $0xd8] sm:$0xff]
        %v488 = vld [vmem:[%s385 + $0xe0] sm:$0xff]
        %v489 = vld [vmem:[%s385 + $0xe8] sm:$0xff]
        %v490 = vld [vmem:[%s385 + $0xf0] sm:$0xff]
        %v491 = vld [vmem:[%s385 + $0xf8] sm:$0xff]
        %v492 = vld [vmem:[%s385 + $0x100] sm:$0xff]
        %v493 = vld [vmem:[%s385 + $0x108] sm:$0xff]
        %v494 = vld [vmem:[%s385 + $0x110] sm:$0xff]
        %v495 = vld [vmem:[%s385 + $0x118] sm:$0xff]
        %v496 = vld [vmem:[%s385 + $0x120] sm:$0xff]
        %v497 = vld [vmem:[%s385 + $0x128] sm:$0xff]
        %v498 = vld [vmem:[%s385 + $0x130] sm:$0xff]
        %v499 = vld [vmem:[%s385 + $0x138] sm:$0xff]
        %v500 = vld [vmem:[%s385 + $0x140] sm:$0xff]
        %v501 = vld [vmem:[%s385 + $0x148] sm:$0xff]
        %v502 = vld [vmem:[%s385 + $0x150] sm:$0xff]
        %v503 = vld [vmem:[%s385 + $0x158] sm:$0xff]
        %v504 = vld [vmem:[%s385 + $0x160] sm:$0xff]
        %v505 = vld [vmem:[%s385 + $0x168] sm:$0xff]
        %v506 = vld [vmem:[%s385 + $0x170] sm:$0xff]
        %v507 = vld [vmem:[%s385 + $0x178] sm:$0xff]
        %v508 = vld [vmem:[%s385 + $0x180] sm:$0xff]
        %v509 = vld [vmem:[%s385 + $0x188] sm:$0xff]
        %v510 = vld [vmem:[%s385 + $0x190] sm:$0xff]
        %v511 = vld [vmem:[%s385 + $0x198] sm:$0xff]
        %v512 = vld [vmem:[%s385 + $0x1a0] sm:$0xff]
        %v513 = vld [vmem:[%s385 + $0x1a8] sm:$0xff]
        %v514 = vld [vmem:[%s385 + $0x1b0] sm:$0xff]
        %v515 = vld [vmem:[%s385 + $0x1b8] sm:$0xff]
        %v516 = vld [vmem:[%s385 + $0x1c0] sm:$0xff]
        %v517 = vld [vmem:[%s385 + $0x1c8] sm:$0xff]
        %v518 = vld [vmem:[%s385 + $0x1d0] sm:$0xff]
        %v519 = vld [vmem:[%s385 + $0x1d8] sm:$0xff]
        %v520 = vld [vmem:[%s385 + $0x1e0] sm:$0xff]
        %v521 = vld [vmem:[%s385 + $0x1e8] sm:$0xff]
        %v522 = vld [vmem:[%s385 + $0x1f0] sm:$0xff]
        %v523 = vld [vmem:[%s385 + $0x1f8] sm:$0xff]
        %v524 = vld [vmem:[%s434] sm:$0xf]
        %v526 = vlaneseq
        %v527 = vshrl.u32 %v526, 7
        %v528 = vsub.s32 0, %v527
        %v529 = vrot.slane %v524, %v528
        %v530 = vlaneseq
        %v531 = vshrl.u32 %v530, 7
        %v532 = vsub.s32 1, %v531
        %v533 = vrot.slane %v524, %v532
        %v534 = vlaneseq
        %v535 = vshrl.u32 %v534, 7
        %v536 = vsub.s32 2, %v535
        %v537 = vrot.slane %v524, %v536
        %v538 = vlaneseq
        %v539 = vshrl.u32 %v538, 7
        %v540 = vsub.s32 3, %v539
        %v541 = vrot.slane %v524, %v540
        %546 = vmatprep.subr.mxu0 %v521
        %547 = vmatpush1.msra.mxu0 %v520
        %548 = vmatprep.subr.mxu0 %v517
        %549 = vmatpush1.msra.mxu0 %v516
        %550 = vmatprep.subr.mxu0 %v513
        %551 = vmatpush1.msra.mxu0 %v512
        %552 = vmatprep.subr.mxu0 %v509
        %553 = vmatpush1.msra.mxu0 %v508
        %554 = vmatprep.subr.mxu0 %v505
        %555 = vmatpush1.msra.mxu0 %v504
        %556 = vmatprep.subr.mxu0 %v501
        %557 = vmatpush1.msra.mxu0 %v500
        %558 = vmatprep.subr.mxu0 %v497
        %559 = vmatpush1.msra.mxu0 %v496
        %560 = vmatprep.subr.mxu0 %v493
        %561 = vmatpush1.msra.mxu0 %v492
        %562 = vmatprep.subr.mxu0 %v489
        %563 = vmatpush1.msra.mxu0 %v488
        %564 = vmatprep.subr.mxu0 %v485
        %565 = vmatpush1.msra.mxu0 %v484
        %566 = vmatprep.subr.mxu0 %v481
        %567 = vmatpush1.msra.mxu0 %v480
        %568 = vmatprep.subr.mxu0 %v477
        %569 = vmatpush1.msra.mxu0 %v476
        %570 = vmatprep.subr.mxu0 %v473
        %571 = vmatpush1.msra.mxu0 %v472
        %572 = vmatprep.subr.mxu0 %v469
        %573 = vmatpush1.msra.mxu0 %v468
        %574 = vmatprep.subr.mxu0 %v465
        %575 = vmatpush1.msra.mxu0 %v464
        %576 = vmatprep.subr.mxu0 %v461
        %577 = vmatpush1.msra.mxu0 %v460
        %578 = vmatprep.subr.mxu0 0.0
        %579 = vmatpush2.msra.mxu0 0.0
        %580 = vmatprep.subr.mxu0 0.0
        %581 = vmatpush2.msra.mxu0 0.0
        %582 = vmatprep.subr.mxu0 0.0
        %583 = vmatpush2.msra.mxu0 0.0
        %584 = vmatprep.subr.mxu0 0.0
        %585 = vmatpush2.msra.mxu0 0.0
        %586 = vmatprep.subr.mxu0 0.0
        %587 = vmatpush2.msra.mxu0 0.0
        %588 = vmatprep.subr.mxu0 0.0
        %589 = vmatpush2.msra.mxu0 0.0
        %590 = vmatprep.subr.mxu0 0.0
        %591 = vmatpush2.msra.mxu0 0.0
        %592 = vmatprep.subr.mxu0 0.0
        %593 = vmatpush2.msra.mxu0 0.0
        %594 = vmatprep.subr.mxu0 0.0
        %595 = vmatpush2.msra.mxu0 0.0
        %596 = vmatprep.subr.mxu0 0.0
        %597 = vmatpush2.msra.mxu0 0.0
        %598 = vmatprep.subr.mxu0 0.0
        %599 = vmatpush2.msra.mxu0 0.0
        %600 = vmatprep.subr.mxu0 0.0
        %601 = vmatpush2.msra.mxu0 0.0
        %602 = vmatprep.subr.mxu0 0.0
        %603 = vmatpush2.msra.mxu0 0.0
        %604 = vmatprep.subr.mxu0 0.0
        %605 = vmatpush2.msra.mxu0 0.0
        %606 = vmatprep.subr.mxu0 0.0
        %607 = vmatpush2.msra.mxu0 0.0
        %608 = vmatprep.subr.mxu0 0.0
        %609 = vmatpush2.msra.mxu0 0.0
        %610 = vmatprep.mubr.f32.mxu0 0.0
        %611 = vmatmul.mubr.f32.gmra.mxu0 %v456
        %v612 = vpop.f32.mrf.mxu0
        %v613 = vadd.f32 %v529, %v612
        %v614 = vpop.f32.mrf.mxu0
        %v615 = vadd.f32 %v533, %v614
        %616 = vmatprep.mubr.f32.mxu0 0.0
        %617 = vmatmul.mubr.f32.gmra.mxu0 %v457
        %v618 = vpop.f32.mrf.mxu0
        %v619 = vadd.f32 %v529, %v618
        %v620 = vpop.f32.mrf.mxu0
        %v621 = vadd.f32 %v533, %v620
        %622 = vmatprep.mubr.f32.mxu0 0.0
        %623 = vmatmul.mubr.f32.gmra.mxu0 %v458
        %v624 = vpop.f32.mrf.mxu0
        %v625 = vadd.f32 %v529, %v624
        %v626 = vpop.f32.mrf.mxu0
        %v627 = vadd.f32 %v533, %v626
        %628 = vmatprep.mubr.f32.mxu0 0.0
        %629 = vmatmul.mubr.f32.gmra.mxu0 %v459
        %v630 = vpop.f32.mrf.mxu0
        %v631 = vadd.f32 %v529, %v630
        %v632 = vpop.f32.mrf.mxu0
        %v633 = vadd.f32 %v533, %v632
        %634 = vdwg.mxu0
        %635 = vmatprep.subr.mxu0 %v523
        %636 = vmatpush1.msra.mxu0 %v522
        %637 = vmatprep.subr.mxu0 %v519
        %638 = vmatpush1.msra.mxu0 %v518
        %639 = vmatprep.subr.mxu0 %v515
        %640 = vmatpush1.msra.mxu0 %v514
        %641 = vmatprep.subr.mxu0 %v511
        %642 = vmatpush1.msra.mxu0 %v510
        %643 = vmatprep.subr.mxu0 %v507
        %644 = vmatpush1.msra.mxu0 %v506
        %645 = vmatprep.subr.mxu0 %v503
        %646 = vmatpush1.msra.mxu0 %v502
        %647 = vmatprep.subr.mxu0 %v499
        %648 = vmatpush1.msra.mxu0 %v498
        %649 = vmatprep.subr.mxu0 %v495
        %650 = vmatpush1.msra.mxu0 %v494
        %651 = vmatprep.subr.mxu0 %v491
        %652 = vmatpush1.msra.mxu0 %v490
        %653 = vmatprep.subr.mxu0 %v487
        %654 = vmatpush1.msra.mxu0 %v486
        %655 = vmatprep.subr.mxu0 %v483
        %656 = vmatpush1.msra.mxu0 %v482
        %657 = vmatprep.subr.mxu0 %v479
        %658 = vmatpush1.msra.mxu0 %v478
        %659 = vmatprep.subr.mxu0 %v475
        %660 = vmatpush1.msra.mxu0 %v474
        %661 = vmatprep.subr.mxu0 %v471
        %662 = vmatpush1.msra.mxu0 %v470
        %663 = vmatprep.subr.mxu0 %v467
        %664 = vmatpush1.msra.mxu0 %v466
        %665 = vmatprep.subr.mxu0 %v463
        %666 = vmatpush1.msra.mxu0 %v462
        %667 = vmatprep.subr.mxu0 0.0
        %668 = vmatpush2.msra.mxu0 0.0
        %669 = vmatprep.subr.mxu0 0.0
        %670 = vmatpush2.msra.mxu0 0.0
        %671 = vmatprep.subr.mxu0 0.0
        %672 = vmatpush2.msra.mxu0 0.0
        %673 = vmatprep.subr.mxu0 0.0
        %674 = vmatpush2.msra.mxu0 0.0
        %675 = vmatprep.subr.mxu0 0.0
        %676 = vmatpush2.msra.mxu0 0.0
        %677 = vmatprep.subr.mxu0 0.0
        %678 = vmatpush2.msra.mxu0 0.0
        %679 = vmatprep.subr.mxu0 0.0
        %680 = vmatpush2.msra.mxu0 0.0
        %681 = vmatprep.subr.mxu0 0.0
        %682 = vmatpush2.msra.mxu0 0.0
        %683 = vmatprep.subr.mxu0 0.0
        %684 = vmatpush2.msra.mxu0 0.0
        %685 = vmatprep.subr.mxu0 0.0
        %686 = vmatpush2.msra.mxu0 0.0
        %687 = vmatprep.subr.mxu0 0.0
        %688 = vmatpush2.msra.mxu0 0.0
        %689 = vmatprep.subr.mxu0 0.0
        %690 = vmatpush2.msra.mxu0 0.0
        %691 = vmatprep.subr.mxu0 0.0
        %692 = vmatpush2.msra.mxu0 0.0
        %693 = vmatprep.subr.mxu0 0.0
        %694 = vmatpush2.msra.mxu0 0.0
        %695 = vmatprep.subr.mxu0 0.0
        %696 = vmatpush2.msra.mxu0 0.0
        %697 = vmatprep.subr.mxu0 0.0
        %698 = vmatpush2.msra.mxu0 0.0
        %699 = vmatprep.mubr.f32.mxu0 0.0
        %700 = vmatmul.mubr.f32.gmra.mxu0 %v456
        %v701 = vpop.f32.mrf.mxu0
        %v702 = vadd.f32 %v537, %v701
        %v703 = vpop.f32.mrf.mxu0
        %v704 = vadd.f32 %v541, %v703
        %705 = vmatprep.mubr.f32.mxu0 0.0
        %706 = vmatmul.mubr.f32.gmra.mxu0 %v457
        %v707 = vpop.f32.mrf.mxu0
        %v708 = vadd.f32 %v537, %v707
        %v709 = vpop.f32.mrf.mxu0
        %v710 = vadd.f32 %v541, %v709
        %711 = vmatprep.mubr.f32.mxu0 0.0
        %712 = vmatmul.mubr.f32.gmra.mxu0 %v458
        %v713 = vpop.f32.mrf.mxu0
        %v714 = vadd.f32 %v537, %v713
        %v715 = vpop.f32.mrf.mxu0
        %v716 = vadd.f32 %v541, %v715
        %717 = vmatprep.mubr.f32.mxu0 0.0
        %718 = vmatmul.mubr.f32.gmra.mxu0 %v459
        %v719 = vpop.f32.mrf.mxu0
        %v720 = vadd.f32 %v537, %v719
        %v721 = vpop.f32.mrf.mxu0
        %v722 = vadd.f32 %v541, %v721
        %723 = vdwg.mxu0
        %v724 = vmul.f32 %v613, 0.5
        %v725 = vmul.f32 %v615, 0.5
        %v726 = vmul.f32 %v702, 0.5
        %v727 = vmul.f32 %v704, 0.5
        %v728 = vmul.f32 %v619, 0.5
        %v729 = vmul.f32 %v621, 0.5
        %v730 = vmul.f32 %v708, 0.5
        %v731 = vmul.f32 %v710, 0.5
        %v732 = vmul.f32 %v625, 0.5
        %v733 = vmul.f32 %v627, 0.5
        %v734 = vmul.f32 %v714, 0.5
        %v735 = vmul.f32 %v716, 0.5
        %v736 = vmul.f32 %v631, 0.5
        %v737 = vmul.f32 %v633, 0.5
        %v738 = vmul.f32 %v720, 0.5
        %v739 = vmul.f32 %v722, 0.5
        %v740 = vmul.f32 %v613, 0.70710677
        %v741 = vmul.f32 %v615, 0.70710677
        %v742 = vmul.f32 %v702, 0.70710677
        %v743 = vmul.f32 %v704, 0.70710677
        %v744 = vmul.f32 %v619, 0.70710677
        %v745 = vmul.f32 %v621, 0.70710677
        %v746 = vmul.f32 %v708, 0.70710677
        %v747 = vmul.f32 %v710, 0.70710677
        %v748 = vmul.f32 %v625, 0.70710677
        %v749 = vmul.f32 %v627, 0.70710677
        %v750 = vmul.f32 %v714, 0.70710677
        %v751 = vmul.f32 %v716, 0.70710677
        %v752 = vmul.f32 %v631, 0.70710677
        %v753 = vmul.f32 %v633, 0.70710677
        %v754 = vmul.f32 %v720, 0.70710677
        %v755 = vmul.f32 %v722, 0.70710677
        %v756 = verf.f32.pop %v740
        %v757 = verf.f32.pop %v741
        %v758 = verf.f32.pop %v742
        %v759 = verf.f32.pop %v743
        %v760 = verf.f32.pop %v744
        %v761 = verf.f32.pop %v745
        %v762 = verf.f32.pop %v746
        %v763 = verf.f32.pop %v747
        %v764 = verf.f32.pop %v748
        %v765 = verf.f32.pop %v749
        %v766 = verf.f32.pop %v750
        %v767 = verf.f32.pop %v751
        %v768 = verf.f32.pop %v752
        %v769 = verf.f32.pop %v753
        %v770 = verf.f32.pop %v754
        %v771 = verf.f32.pop %v755
        %v772 = vadd.f32 %v756, 1.0
        %v773 = vadd.f32 %v757, 1.0
        %v774 = vadd.f32 %v758, 1.0
        %v775 = vadd.f32 %v759, 1.0
        %v776 = vadd.f32 %v760, 1.0
        %v777 = vadd.f32 %v761, 1.0
        %v778 = vadd.f32 %v762, 1.0
        %v779 = vadd.f32 %v763, 1.0
        %v780 = vadd.f32 %v764, 1.0
        %v781 = vadd.f32 %v765, 1.0
        %v782 = vadd.f32 %v766, 1.0
        %v783 = vadd.f32 %v767, 1.0
        %v784 = vadd.f32 %v768, 1.0
        %v785 = vadd.f32 %v769, 1.0
        %v786 = vadd.f32 %v770, 1.0
        %v787 = vadd.f32 %v771, 1.0
        %v788 = vmul.f32 %v724, %v772
        %v789 = vmul.f32 %v725, %v773
        %v790 = vmul.f32 %v726, %v774
        %v791 = vmul.f32 %v727, %v775
        %v792 = vmul.f32 %v728, %v776
        %v793 = vmul.f32 %v729, %v777
        %v794 = vmul.f32 %v730, %v778
        %v795 = vmul.f32 %v731, %v779
        %v796 = vmul.f32 %v732, %v780
        %v797 = vmul.f32 %v733, %v781
        %v798 = vmul.f32 %v734, %v782
        %v799 = vmul.f32 %v735, %v783
        %v800 = vmul.f32 %v736, %v784
        %v801 = vmul.f32 %v737, %v785
        %v802 = vmul.f32 %v738, %v786
        %v803 = vmul.f32 %v739, %v787
        %v804 = vld [vmem:[#allocation2] sm:$0xff]
        %v805 = vld [vmem:[#allocation2 + $0x8] sm:$0xff]
        %v806 = vld [vmem:[#allocation2 + $0x10] sm:$0xff]
        %v807 = vld [vmem:[#allocation2 + $0x18] sm:$0xff]
        %v808 = vld [vmem:[%s440] sm:$0xff]
        %v809 = vld [vmem:[%s440 + $0x8] sm:$0xff]
        %v810 = vld [vmem:[%s440 + $0x10] sm:$0xff]
        %v811 = vld [vmem:[%s440 + $0x18] sm:$0xff]
        %v812 = vld [vmem:[%s440 + $0x20] sm:$0xff]
        %v813 = vld [vmem:[%s440 + $0x28] sm:$0xff]
        %v814 = vld [vmem:[%s440 + $0x30] sm:$0xff]
        %v815 = vld [vmem:[%s440 + $0x38] sm:$0xff]
        %v816 = vld [vmem:[%s440 + $0x40] sm:$0xff]
        %v817 = vld [vmem:[%s440 + $0x48] sm:$0xff]
        %v818 = vld [vmem:[%s440 + $0x50] sm:$0xff]
        %v819 = vld [vmem:[%s440 + $0x58] sm:$0xff]
        %v820 = vld [vmem:[%s440 + $0x60] sm:$0xff]
        %v821 = vld [vmem:[%s440 + $0x68] sm:$0xff]
        %v822 = vld [vmem:[%s440 + $0x70] sm:$0xff]
        %v823 = vld [vmem:[%s440 + $0x78] sm:$0xff]
        %v824 = vld [vmem:[%s440 + $0x80] sm:$0xff]
        %v825 = vld [vmem:[%s440 + $0x88] sm:$0xff]
        %v826 = vld [vmem:[%s440 + $0x90] sm:$0xff]
        %v827 = vld [vmem:[%s440 + $0x98] sm:$0xff]
        %v828 = vld [vmem:[%s440 + $0xa0] sm:$0xff]
        %v829 = vld [vmem:[%s440 + $0xa8] sm:$0xff]
        %v830 = vld [vmem:[%s440 + $0xb0] sm:$0xff]
        %v831 = vld [vmem:[%s440 + $0xb8] sm:$0xff]
        %v832 = vld [vmem:[%s440 + $0xc0] sm:$0xff]
        %v833 = vld [vmem:[%s440 + $0xc8] sm:$0xff]
        %v834 = vld [vmem:[%s440 + $0xd0] sm:$0xff]
        %v835 = vld [vmem:[%s440 + $0xd8] sm:$0xff]
        %v836 = vld [vmem:[%s440 + $0xe0] sm:$0xff]
        %v837 = vld [vmem:[%s440 + $0xe8] sm:$0xff]
        %v838 = vld [vmem:[%s440 + $0xf0] sm:$0xff]
        %v839 = vld [vmem:[%s440 + $0xf8] sm:$0xff]
        %v840 = vld [vmem:[%s440 + $0x100] sm:$0xff]
        %v841 = vld [vmem:[%s440 + $0x108] sm:$0xff]
        %v842 = vld [vmem:[%s440 + $0x110] sm:$0xff]
        %v843 = vld [vmem:[%s440 + $0x118] sm:$0xff]
        %v844 = vld [vmem:[%s440 + $0x120] sm:$0xff]
        %v845 = vld [vmem:[%s440 + $0x128] sm:$0xff]
        %v846 = vld [vmem:[%s440 + $0x130] sm:$0xff]
        %v847 = vld [vmem:[%s440 + $0x138] sm:$0xff]
        %v848 = vld [vmem:[%s440 + $0x140] sm:$0xff]
        %v849 = vld [vmem:[%s440 + $0x148] sm:$0xff]
        %v850 = vld [vmem:[%s440 + $0x150] sm:$0xff]
        %v851 = vld [vmem:[%s440 + $0x158] sm:$0xff]
        %v852 = vld [vmem:[%s440 + $0x160] sm:$0xff]
        %v853 = vld [vmem:[%s440 + $0x168] sm:$0xff]
        %v854 = vld [vmem:[%s440 + $0x170] sm:$0xff]
        %v855 = vld [vmem:[%s440 + $0x178] sm:$0xff]
        %v856 = vld [vmem:[%s440 + $0x180] sm:$0xff]
        %v857 = vld [vmem:[%s440 + $0x188] sm:$0xff]
        %v858 = vld [vmem:[%s440 + $0x190] sm:$0xff]
        %v859 = vld [vmem:[%s440 + $0x198] sm:$0xff]
        %v860 = vld [vmem:[%s440 + $0x1a0] sm:$0xff]
        %v861 = vld [vmem:[%s440 + $0x1a8] sm:$0xff]
        %v862 = vld [vmem:[%s440 + $0x1b0] sm:$0xff]
        %v863 = vld [vmem:[%s440 + $0x1b8] sm:$0xff]
        %v864 = vld [vmem:[%s440 + $0x1c0] sm:$0xff]
        %v865 = vld [vmem:[%s440 + $0x1c8] sm:$0xff]
        %v866 = vld [vmem:[%s440 + $0x1d0] sm:$0xff]
        %v867 = vld [vmem:[%s440 + $0x1d8] sm:$0xff]
        %v868 = vld [vmem:[%s440 + $0x1e0] sm:$0xff]
        %v869 = vld [vmem:[%s440 + $0x1e8] sm:$0xff]
        %v870 = vld [vmem:[%s440 + $0x1f0] sm:$0xff]
        %v871 = vld [vmem:[%s440 + $0x1f8] sm:$0xff]
        %872 = vmatprep.subr.mxu0 0.0
        %873 = vmatpush1.msra.mxu0 %v823
        %874 = vmatprep.subr.mxu0 0.0
        %875 = vmatpush1.msra.mxu0 %v822
        %876 = vmatprep.subr.mxu0 0.0
        %877 = vmatpush1.msra.mxu0 %v821
        %878 = vmatprep.subr.mxu0 0.0
        %879 = vmatpush1.msra.mxu0 %v820
        %880 = vmatprep.subr.mxu0 0.0
        %881 = vmatpush1.msra.mxu0 %v819
        %882 = vmatprep.subr.mxu0 0.0
        %883 = vmatpush1.msra.mxu0 %v818
        %884 = vmatprep.subr.mxu0 0.0
        %885 = vmatpush1.msra.mxu0 %v817
        %886 = vmatprep.subr.mxu0 0.0
        %887 = vmatpush1.msra.mxu0 %v816
        %888 = vmatprep.subr.mxu0 0.0
        %889 = vmatpush1.msra.mxu0 %v815
        %890 = vmatprep.subr.mxu0 0.0
        %891 = vmatpush1.msra.mxu0 %v814
        %892 = vmatprep.subr.mxu0 0.0
        %893 = vmatpush1.msra.mxu0 %v813
        %894 = vmatprep.subr.mxu0 0.0
        %895 = vmatpush1.msra.mxu0 %v812
        %896 = vmatprep.subr.mxu0 0.0
        %897 = vmatpush1.msra.mxu0 %v811
        %898 = vmatprep.subr.mxu0 0.0
        %899 = vmatpush1.msra.mxu0 %v810
        %900 = vmatprep.subr.mxu0 0.0
        %901 = vmatpush1.msra.mxu0 %v809
        %902 = vmatprep.subr.mxu0 0.0
        %903 = vmatpush1.msra.mxu0 %v808
        %904 = vmatprep.subr.mxu0 0.0
        %905 = vmatpush2.msra.mxu0 %v839
        %906 = vmatprep.subr.mxu0 0.0
        %907 = vmatpush2.msra.mxu0 %v838
        %908 = vmatprep.subr.mxu0 0.0
        %909 = vmatpush2.msra.mxu0 %v837
        %910 = vmatprep.subr.mxu0 0.0
        %911 = vmatpush2.msra.mxu0 %v836
        %912 = vmatprep.subr.mxu0 0.0
        %913 = vmatpush2.msra.mxu0 %v835
        %914 = vmatprep.subr.mxu0 0.0
        %915 = vmatpush2.msra.mxu0 %v834
        %916 = vmatprep.subr.mxu0 0.0
        %917 = vmatpush2.msra.mxu0 %v833
        %918 = vmatprep.subr.mxu0 0.0
        %919 = vmatpush2.msra.mxu0 %v832
        %920 = vmatprep.subr.mxu0 0.0
        %921 = vmatpush2.msra.mxu0 %v831
        %922 = vmatprep.subr.mxu0 0.0
        %923 = vmatpush2.msra.mxu0 %v830
        %924 = vmatprep.subr.mxu0 0.0
        %925 = vmatpush2.msra.mxu0 %v829
        %926 = vmatprep.subr.mxu0 0.0
        %927 = vmatpush2.msra.mxu0 %v828
        %928 = vmatprep.subr.mxu0 0.0
        %929 = vmatpush2.msra.mxu0 %v827
        %930 = vmatprep.subr.mxu0 0.0
        %931 = vmatpush2.msra.mxu0 %v826
        %932 = vmatprep.subr.mxu0 0.0
        %933 = vmatpush2.msra.mxu0 %v825
        %934 = vmatprep.subr.mxu0 0.0
        %935 = vmatpush2.msra.mxu0 %v824
        %936 = vmatprep.mubr.f32.mxu0 %v789
        %937 = vmatmul.mubr.f32.gmra.mxu0 %v788
        %v938 = vpop.f32.mrf.mxu0
        %v939 = vadd.f32 0.0, %v938
        %v940 = vpop.f32.mrf.mxu0
        %941 = vmatprep.mubr.f32.mxu0 %v793
        %942 = vmatmul.mubr.f32.gmra.mxu0 %v792
        %v943 = vpop.f32.mrf.mxu0
        %v944 = vadd.f32 0.0, %v943
        %v945 = vpop.f32.mrf.mxu0
        %946 = vmatprep.mubr.f32.mxu0 %v797
        %947 = vmatmul.mubr.f32.gmra.mxu0 %v796
        %v948 = vpop.f32.mrf.mxu0
        %v949 = vadd.f32 0.0, %v948
        %v950 = vpop.f32.mrf.mxu0
        %951 = vmatprep.mubr.f32.mxu0 %v801
        %952 = vmatmul.mubr.f32.gmra.mxu0 %v800
        %v953 = vpop.f32.mrf.mxu0
        %v954 = vadd.f32 0.0, %v953
        %v955 = vpop.f32.mrf.mxu0
        %956 = vdwg.mxu0
        %957 = vmatprep.subr.mxu0 0.0
        %958 = vmatpush1.msra.mxu0 %v855
        %959 = vmatprep.subr.mxu0 0.0
        %960 = vmatpush1.msra.mxu0 %v854
        %961 = vmatprep.subr.mxu0 0.0
        %962 = vmatpush1.msra.mxu0 %v853
        %963 = vmatprep.subr.mxu0 0.0
        %964 = vmatpush1.msra.mxu0 %v852
        %965 = vmatprep.subr.mxu0 0.0
        %966 = vmatpush1.msra.mxu0 %v851
        %967 = vmatprep.subr.mxu0 0.0
        %968 = vmatpush1.msra.mxu0 %v850
        %969 = vmatprep.subr.mxu0 0.0
        %970 = vmatpush1.msra.mxu0 %v849
        %971 = vmatprep.subr.mxu0 0.0
        %972 = vmatpush1.msra.mxu0 %v848
        %973 = vmatprep.subr.mxu0 0.0
        %974 = vmatpush1.msra.mxu0 %v847
        %975 = vmatprep.subr.mxu0 0.0
        %976 = vmatpush1.msra.mxu0 %v846
        %977 = vmatprep.subr.mxu0 0.0
        %978 = vmatpush1.msra.mxu0 %v845
        %979 = vmatprep.subr.mxu0 0.0
        %980 = vmatpush1.msra.mxu0 %v844
        %981 = vmatprep.subr.mxu0 0.0
        %982 = vmatpush1.msra.mxu0 %v843
        %983 = vmatprep.subr.mxu0 0.0
        %984 = vmatpush1.msra.mxu0 %v842
        %985 = vmatprep.subr.mxu0 0.0
        %986 = vmatpush1.msra.mxu0 %v841
        %987 = vmatprep.subr.mxu0 0.0
        %988 = vmatpush1.msra.mxu0 %v840
        %989 = vmatprep.subr.mxu0 0.0
        %990 = vmatpush2.msra.mxu0 %v871
        %991 = vmatprep.subr.mxu0 0.0
        %992 = vmatpush2.msra.mxu0 %v870
        %993 = vmatprep.subr.mxu0 0.0
        %994 = vmatpush2.msra.mxu0 %v869
        %995 = vmatprep.subr.mxu0 0.0
        %996 = vmatpush2.msra.mxu0 %v868
        %997 = vmatprep.subr.mxu0 0.0
        %998 = vmatpush2.msra.mxu0 %v867
        %999 = vmatprep.subr.mxu0 0.0
        %1000 = vmatpush2.msra.mxu0 %v866
        %1001 = vmatprep.subr.mxu0 0.0
        %1002 = vmatpush2.msra.mxu0 %v865
        %1003 = vmatprep.subr.mxu0 0.0
        %1004 = vmatpush2.msra.mxu0 %v864
        %1005 = vmatprep.subr.mxu0 0.0
        %1006 = vmatpush2.msra.mxu0 %v863
        %1007 = vmatprep.subr.mxu0 0.0
        %1008 = vmatpush2.msra.mxu0 %v862
        %1009 = vmatprep.subr.mxu0 0.0
        %1010 = vmatpush2.msra.mxu0 %v861
        %1011 = vmatprep.subr.mxu0 0.0
        %1012 = vmatpush2.msra.mxu0 %v860
        %1013 = vmatprep.subr.mxu0 0.0
        %1014 = vmatpush2.msra.mxu0 %v859
        %1015 = vmatprep.subr.mxu0 0.0
        %1016 = vmatpush2.msra.mxu0 %v858
        %1017 = vmatprep.subr.mxu0 0.0
        %1018 = vmatpush2.msra.mxu0 %v857
        %1019 = vmatprep.subr.mxu0 0.0
        %1020 = vmatpush2.msra.mxu0 %v856
        %1021 = vmatprep.mubr.f32.mxu0 %v791
        %1022 = vmatmul.mubr.f32.gmra.mxu0 %v790
        %v1023 = vpop.f32.mrf.mxu0
        %v1024 = vadd.f32 %v939, %v1023
        %v1025 = vpop.f32.mrf.mxu0
        %1026 = vmatprep.mubr.f32.mxu0 %v795
        %1027 = vmatmul.mubr.f32.gmra.mxu0 %v794
        %v1028 = vpop.f32.mrf.mxu0
        %v1029 = vadd.f32 %v944, %v1028
        %v1030 = vpop.f32.mrf.mxu0
        %1031 = vmatprep.mubr.f32.mxu0 %v799
        %1032 = vmatmul.mubr.f32.gmra.mxu0 %v798
        %v1033 = vpop.f32.mrf.mxu0
        %v1034 = vadd.f32 %v949, %v1033
        %v1035 = vpop.f32.mrf.mxu0
        %1036 = vmatprep.mubr.f32.mxu0 %v803
        %1037 = vmatmul.mubr.f32.gmra.mxu0 %v802
        %v1038 = vpop.f32.mrf.mxu0
        %v1039 = vadd.f32 %v954, %v1038
        %v1040 = vpop.f32.mrf.mxu0
        %1041 = vdwg.mxu0
        %v1042 = vadd.f32 %v804, %v1024
        %v1043 = vadd.f32 %v805, %v1029
        %v1044 = vadd.f32 %v806, %v1034
        %v1045 = vadd.f32 %v807, %v1039
        %1046 = vst [vmem:[#allocation2] sm:$0xff] %v1042
        %1047 = vst [vmem:[#allocation2 + $0x8] sm:$0xff] %v1043
        %1048 = vst [vmem:[#allocation2 + $0x10] sm:$0xff] %v1044
        %1049 = vst [vmem:[#allocation2 + $0x18] sm:$0xff] %v1045
        %p1050 = scmp.eq.s32.totalorder %s21, 1
        // Predicated region
        $region68: #{slam_forward.20} parent=58 // pred_check
          %p1051 = pneg %p1050
        $region69: #{slam_forward.20} parent=58 // pred_check_branch
          %1053 = sbr.rel (%p1051) target = $region71
        $region70: #{slam_forward.20} parent=58 // pred_region
          %v1054 = vld [vmem:[#allocation2] sm:$0xff]
          %v1055 = vld [vmem:[#allocation2 + $0x8] sm:$0xff]
          %v1056 = vld [vmem:[#allocation2 + $0x10] sm:$0xff]
          %v1057 = vld [vmem:[#allocation2 + $0x18] sm:$0xff]
          %v1058 = vld [vmem:[%s4] sm:$0x1]
          %v1060 = vlaneseq
          %v1061 = vshrl.u32 %v1060, 7
          %v1062 = vsub.s32 0, %v1061
          %v1063 = vrot.slane %v1058, %v1062
          %v1065 = vadd.f32 %v1054, %v1063
          %v1066 = vadd.f32 %v1055, %v1063
          %v1067 = vadd.f32 %v1056, %v1063
          %v1068 = vadd.f32 %v1057, %v1063
          %1069 = vst [vmem:[%s446] sm:$0xff] %v1065
          %1070 = vst [vmem:[%s446 + $0x8] sm:$0xff] %v1066
          %1071 = vst [vmem:[%s446 + $0x10] sm:$0xff] %v1067
          %1072 = vst [vmem:[%s446 + $0x18] sm:$0xff] %v1068
        $region71: #{slam_forward.20} parent=58 // pred_fallthru
          _
        %s1073 = smul.u32 4, %s20
        %p1074 = scmp.lt.s32.totalorder %s1073, 3
        %s1075 = scalar_select %p1074, %s1073, 3
        %s1076 = smul.addr %s1075, 8
        %s1077 = scalar_lea.vmem %s5, %s1076
        // Predicated region
        $region72: #{slam_forward.20} parent=58 // pred_check
          %p1078 = pneg %p171
        $region73: #{slam_forward.20} parent=58 // pred_check_branch
          %1080 = sbr.rel (%p1078) target = $region75
        $region74: #{slam_forward.20} parent=58 // pred_region
          %s1081 = smul.u32 4, %s20
        $region75: #{slam_forward.20} parent=58 // pred_fallthru
          _
        // Predicated region
        $region76: #{slam_forward.20} parent=58 // pred_check
          %p1082 = pneg %p171
        $region77: #{slam_forward.20} parent=58 // pred_check_branch
          %1084 = sbr.rel (%p1082) target = $region79
        $region78: #{slam_forward.20} parent=58 // pred_region
          %s1085 = smul.u32 4, %s20
          %p1086 = scmp.lt.s32.totalorder %s1085, 3
          %s1087 = scalar_select %p1086, %s1085, 3
          %s1088 = smul.addr %s1087, 8
          %s1089 = scalar_lea.vmem %s5, %s1088
        $region79: #{slam_forward.20} parent=58 // pred_fallthru
          _
      $region59: #{slam_forward.20} parent=5 // pred_fallthru
        _
      %p1090 = scmp.le.s32.totalorder 2, %s11
      // Predicated region
      $region80: #{slam_forward.20} parent=5 // pred_check
        %p1091 = pneg %p1090
      $region81: #{slam_forward.20} parent=5 // pred_check_branch
        %1093 = sbr.rel (%p1091) target = $region83
      $region82: #{slam_forward.20} parent=5 // pred_region
        %s1094 = ssub.s32 %s11, 2
      $region83: #{slam_forward.20} parent=5 // pred_fallthru
        _
    $region6: #{slam_forward.20} parent=1 // loop_footer
      %s15 = sadd.s32 1, %s11
    $region7: #{slam_forward.20} parent=1 // loop_footer_branch
      %10 = sbr.rel target = $region3
    $region8: #{slam_forward.20} parent=1 // loop_exit
      _

</llo_original>
